<compile_context>
chip_gen: v7x
topology: tpu7x:2x2x1
jax: 0.10.0
libtpu: 0.0.40
codegen_flags: <defaults>
</compile_context>

<pallas_src>
import functools

import jax
import jax.numpy as jnp
from jax.experimental import pallas as pl
from jax.experimental.pallas import tpu as pltpu


def _elu(h):
    # PyTorch nn.ELU(alpha=1.0); exp(min(h, 0)) keeps the inactive branch finite.
    return jnp.where(h > 0, h, jnp.exp(jnp.minimum(h, 0.0)) - 1.0)


def _relu(h):
    return jnp.maximum(h, 0.0)


def _round_up(n, m):
    return ((n + m - 1) // m) * m


def _tpu_defaults():
    """Generation-dependent (tk_target, vmem_limit_bytes).

    128 MiB VMEM (v5e/v6e) -> large K tiles + 100 MiB scoped limit;
    otherwise (v7x / unknown) -> v7x-safe 32768 / 48 MiB."""
    vmem_cap = None
    try:
        info = pltpu.get_tpu_info()
        vmem_cap = getattr(info, "vmem_capacity_bytes", None)
    except Exception:
        vmem_cap = None
    if vmem_cap is not None and vmem_cap >= 96 * 1024 * 1024:
        return 65536, 100 * 1024 * 1024     # v5e / v6e
    return 32768, 48 * 1024 * 1024          # v7x-safe fallback


# -----------------------------------------------------------------------------
# Kernel
# -----------------------------------------------------------------------------
def deepsets_kernel(S,
                    x_ref, wf_ref, bf_ref,
                    t50_ref, tS_ref, t30_ref, t10_ref, t1_ref,
                    o_ref,
                    acc_ref):
    k = pl.program_id(0)          # K reduction tiles (OUTER): wf fetched once per k
    b = pl.program_id(1)          # batch tiles (INNER): wf never re-fetched across b

    @pl.when(k == 0)
    def _():
        acc_ref[b] = jnp.zeros(acc_ref.shape[1:], acc_ref.dtype)

    # Streamed fused first layer [w1 | lw1]: one MXU push per (k, b) tile,
    # f32 accumulation into this batch tile's slab entry.
    acc_ref[b] = acc_ref[b] + jnp.dot(x_ref[...], wf_ref[...],
                                      preferred_element_type=jnp.float32)

    @pl.when(k == pl.num_programs(0) - 1)
    def _():
        # ---- unpack the packed, VMEM-resident tail weights (static slices) ----
        t50 = t50_ref[...]
        w2, lw2 = t50[:50], t50[50:100]
        b2, lb2 = t50[100:101], t50[101:102]
        tS = tS_ref[...]
        w3, lw3 = tS[:50], tS[50:100]
        b3, lb3 = tS[100:101], tS[101:102]
        t30 = t30_ref[...]
        wl1a, wl1b = t30[:S], t30[S:2 * S]
        bl1 = t30[2 * S:2 * S + 1]
        rw1a = t30[2 * S + 1:2 * S + 31]
        rw1b = t30[2 * S + 31:3 * S + 31]
        rw1c = t30[3 * S + 31:4 * S + 31]
        rb1 = t30[4 * S + 31:4 * S + 32]
        t10 = t10_ref[...]
        rw2, rb2 = t10[:30], t10[30:31]
        t1 = t1_ref[...]
        rw3, rb3 = t1[:10], t1[10:11]

        def lin(h, w, bias):
            return jnp.dot(h, w, preferred_element_type=jnp.float32) + bias

        pre = acc_ref[b] + bf_ref[...]            # (TB, 100)
        h0 = pre[:, :50]                          # feature_extractor pre-act
        g0 = pre[:, 50:]                          # log_feature_extractor pre-act

        # ---- feature_extractor tail: ELU -> Linear -> ELU -> Linear ----
        h = _elu(h0)
        h = _elu(lin(h, w2, b2))
        x1 = lin(h, w3, b3)                       # (TB, S)

        # ---- log_feature_extractor tail: ReLU -> Linear -> ReLU -> Linear -> ReLU ----
        g = _relu(g0)
        g = _relu(lin(g, lw2, lb2))
        x2 = _relu(lin(g, lw3, lb3))              # (TB, S)
        x2 = jnp.log(x2 + 0.001)

        # ---- x = cat(x1, x2); y1 = l1(x); r = relu(x) + 0.001 (concat as split matmuls) ----
        y1 = (jnp.dot(x1, wl1a, preferred_element_type=jnp.float32)
              + jnp.dot(x2, wl1b, preferred_element_type=jnp.float32) + bl1)  # (TB, 30)
        r1 = _relu(x1) + 0.001
        r2 = _relu(x2) + 0.001

        # ---- regressor on cat(y1, r1, r2): ELU -> Linear(130,30) -> ELU -> Linear(30,10) -> ELU -> Linear(10,1) ----
        e0, e1, e2 = _elu(y1), _elu(r1), _elu(r2)
        z = (jnp.dot(e0, rw1a, preferred_element_type=jnp.float32)
             + jnp.dot(e1, rw1b, preferred_element_type=jnp.float32)
             + jnp.dot(e2, rw1c, preferred_element_type=jnp.float32) + rb1)   # (TB, 30)
        z = _elu(z)
        z = _elu(lin(z, rw2, rb2))                # (TB, 10)
        z = lin(z, rw3, rb3)                      # (TB, 1)

        o_ref[...] = z.astype(o_ref.dtype)


# -----------------------------------------------------------------------------
# Parameter construction / one-time fusion & packing
# -----------------------------------------------------------------------------
def make_params(key, in_features, set_features):
    """PyTorch-style init U(-1/sqrt(fan_in), 1/sqrt(fan_in)); weights stored (in, out)."""
    def linear(k, fin, fout):
        kw, kb = jax.random.split(k)
        bound = 1.0 / jnp.sqrt(float(fin))
        w = jax.random.uniform(kw, (fin, fout), jnp.float32, -bound, bound)
        b = jax.random.uniform(kb, (1, fout), jnp.float32, -bound, bound)
        return w, b

    ks = jax.random.split(key, 10)
    p = {}
    p["w1"], p["b1"] = linear(ks[0], in_features, 50)
    p["w2"], p["b2"] = linear(ks[1], 50, 50)
    p["w3"], p["b3"] = linear(ks[2], 50, set_features)
    p["lw1"], p["lb1"] = linear(ks[3], in_features, 50)
    p["lw2"], p["lb2"] = linear(ks[4], 50, 50)
    p["lw3"], p["lb3"] = linear(ks[5], 50, set_features)
    p["wl1"], p["bl1"] = linear(ks[6], 2 * set_features, 30)
    p["rw1"], p["rb1"] = linear(ks[7], 30 + 2 * set_features, 30)
    p["rw2"], p["rb2"] = linear(ks[8], 30, 10)
    p["rw3"], p["rb3"] = linear(ks[9], 10, 1)
    return p


def prepare_fused_params(params, set_features, *,
                         stream_dtype=jnp.bfloat16,
                         tb_target=128,
                         tk_target=None,
                         vmem_limit_bytes=None):
    """One-time (per weight set) fusion/packing/casting, hoisted out of forward().

    Keeps the huge streamed weight pre-cast to `stream_dtype` and pre-padded to a
    multiple of the K tile so no per-call HBM copy of it is ever materialized."""
    S = set_features
    K = params["w1"].shape[0]

    d_tk, d_vmem = _tpu_defaults()
    tk_target = d_tk if tk_target is None else tk_target
    vmem_limit_bytes = d_vmem if vmem_limit_bytes is None else vmem_limit_bytes

    itemsize = jnp.dtype(stream_dtype).itemsize
    b_align = max(8, 32 // itemsize)                       # packed-sublane multiple
    tb_bound = _round_up(max(tb_target, b_align), b_align)

    # K tile: as large as the double-buffered streamed x / wf tiles allow.
    tk = _round_up(min(tk_target, K), 128)
    budget = int(0.65 * vmem_limit_bytes)
    max_tk = budget // (2 * (tb_bound + 100) * itemsize)
    tk = max(128, min(tk, max(128, (max_tk // 128) * 128)))
    kp = _round_up(K, tk)

    # Fused first layer [w1 | lw1] -> (Kp, 100); zero K-padding adds nothing.
    wf = jnp.concatenate([params["w1"], params["lw1"]], axis=1)
    if kp != K:
        wf = jnp.pad(wf, ((0, kp - K), (0, 0)))
    wf = wf.astype(stream_dtype)
    bf = jnp.concatenate([params["b1"], params["lb1"]], axis=1)        # (1, 100) f32

    # Pack the tiny tail weights into 5 resident f32 slabs (one DMA each).
    t50 = jnp.concatenate([params["w2"], params["lw2"], params["b2"], params["lb2"]], axis=0)
    tS = jnp.concatenate([params["w3"], params["lw3"], params["b3"], params["lb3"]], axis=0)
    t30 = jnp.concatenate([params["wl1"][:S], params["wl1"][S:], params["bl1"],
                           params["rw1"][:30], params["rw1"][30:30 + S],
                           params["rw1"][30 + S:], params["rb1"]], axis=0)
    t10 = jnp.concatenate([params["rw2"], params["rb2"]], axis=0)
    t1 = jnp.concatenate([params["rw3"], params["rb3"]], axis=0)

    return dict(wf=wf, bf=bf, t50=t50, tS=tS, t30=t30, t10=t10, t1=t1,
                S=S, K=K, Kp=kp, TK=tk, stream_dtype=stream_dtype,
                tb_target=tb_target, b_align=b_align,
                vmem_limit_bytes=vmem_limit_bytes)


# -----------------------------------------------------------------------------
# Forward
# -----------------------------------------------------------------------------
def deepsets_forward(x, fused):
    """x: (B, K); ideally already cast to fused['stream_dtype'] by the caller."""
    B, K = x.shape
    assert K == fused["K"], (K, fused["K"])
    S = fused["S"]
    TK, Kp = fused["TK"], fused["Kp"]
    stream_dtype = fused["stream_dtype"]
    b_align = fused["b_align"]

    TB = _round_up(min(fused["tb_target"], B), b_align)
    Bp = _round_up(B, TB)
    nb, nk = Bp // TB, Kp // TK

    if x.dtype != stream_dtype:
        x = x.astype(stream_dtype)          # prefer hoisting this cast to the caller
    if (Bp, Kp) != (B, K):
        x = jnp.pad(x, ((0, Bp - B), (0, Kp - K)))

    itemsize = jnp.dtype(stream_dtype).itemsize
    tail_bytes = 4 * (fused["bf"].size + fused["t50"].size + fused["tS"].size
                      + fused["t30"].size + fused["t10"].size + fused["t1"].size)
    cost = pl.CostEstimate(
        flops=2 * Bp * Kp * 100,
        transcendentals=Bp * 200,
        bytes_accessed=(Bp * Kp + Kp * 100) * itemsize + tail_bytes + Bp * 4,
    )

    const = lambda k, b: (0, 0)
    out = pl.pallas_call(
        functools.partial(deepsets_kernel, S),
        out_shape=jax.ShapeDtypeStruct((Bp, 1), jnp.float32),
        grid_spec=pltpu.PrefetchScalarGridSpec(
            num_scalar_prefetch=0,
            # K (reduction) OUTER, batch tiles INNER: wf's block index changes only
            # with k, so the ~Kp*100 weight is streamed from HBM exactly once.
            grid=(nk, nb),
            in_specs=[
                pl.BlockSpec((TB, TK), lambda k, b: (b, k)),    # x: streamed once
                pl.BlockSpec((TK, 100), lambda k, b: (k, 0)),   # fused W: streamed once
                pl.BlockSpec(fused["bf"].shape, const),
                pl.BlockSpec(fused["t50"].shape, const),
                pl.BlockSpec(fused["tS"].shape, const),
                pl.BlockSpec(fused["t30"].shape, const),
                pl.BlockSpec(fused["t10"].shape, const),
                pl.BlockSpec(fused["t1"].shape, const),
            ],
            out_specs=pl.BlockSpec((TB, 1), lambda k, b: (b, 0)),
            scratch_shapes=[pltpu.VMEM((nb, TB, 100), jnp.float32)],
        ),
        compiler_params=pltpu.CompilerParams(
            dimension_semantics=("arbitrary", "arbitrary"),
            vmem_limit_bytes=fused["vmem_limit_bytes"],
        ),
        cost_estimate=cost,
    )(x, fused["wf"], fused["bf"], fused["t50"], fused["tS"],
      fused["t30"], fused["t10"], fused["t1"])
    return out[:B]


# -----------------------------------------------------------------------------
# Pure-JAX reference (mirrors the PyTorch forward)
# -----------------------------------------------------------------------------
def deepsets_reference(x, params, first_layer_dtype=jnp.float32):
    xs = x.astype(first_layer_dtype)
    h0 = jnp.dot(xs, params["w1"].astype(first_layer_dtype),
                 preferred_element_type=jnp.float32) + params["b1"]
    g0 = jnp.dot(xs, params["lw1"].astype(first_layer_dtype),
                 preferred_element_type=jnp.float32) + params["lb1"]

    h = _elu(h0)
    h = _elu(h @ params["w2"] + params["b2"])
    x1 = h @ params["w3"] + params["b3"]

    g = _relu(g0)
    g = _relu(g @ params["lw2"] + params["lb2"])
    x2 = _relu(g @ params["lw3"] + params["lb3"]) + 0.001
    x2 = jnp.log(x2)

    xc = jnp.concatenate([x1, x2], axis=1)                # (B, 2S)
    y1 = xc @ params["wl1"] + params["bl1"]               # (B, 30)
    y2 = _relu(xc) + 0.001                                # (B, 2S)
    xc = jnp.concatenate([y1, y2], axis=1)                # (B, 30+2S)

    z = _elu(xc)
    z = _elu(z @ params["rw1"] + params["rb1"])
    z = _elu(z @ params["rw2"] + params["rb2"])
    z = z @ params["rw3"] + params["rb3"]
    return z


if __name__ == "__main__":
    B = 32
    IN_FEATURES = 1024      # small stand-in for the real 8388608
    SET_FEATURES = 50

    key = jax.random.PRNGKey(0)
    k_x, k_p = jax.random.split(key)
    x = jax.random.normal(k_x, (B, IN_FEATURES), dtype=jnp.float32)
    params = make_params(k_p, IN_FEATURES, SET_FEATURES)

    ref32 = jax.block_until_ready(deepsets_reference(x, params))

    # 1) strict check: f32 streaming vs the exact PyTorch-equivalent reference.
    #    Small tile targets so the demo exercises the full (k, b) grid: (4, 2).
    fused32 = prepare_fused_params(params, SET_FEATURES, stream_dtype=jnp.float32,
                                   tb_target=16, tk_target=256)
    out32 = jax.block_until_ready(deepsets_forward(x, fused32))
    assert out32.shape == (B, 1), out32.shape
    assert jnp.allclose(out32, ref32, rtol=5e-3, atol=5e-3), (out32, ref32)

    # 2) bandwidth-optimized bf16 streaming (default). First validate the bf16
    #    first-layer pre-activations against true f32 (the only place the bf16
    #    cast acts); the end-to-end bf16 check uses a matched-quantization
    #    reference because log(relu(.)+1e-3) is ill-conditioned near zero and
    #    legitimately amplifies any quantization of the pre-activations.
    wf32 = jnp.concatenate([params["w1"], params["lw1"]], axis=1)
    pre32 = x @ wf32
    pre16 = jnp.dot(x.astype(jnp.bfloat16), wf32.astype(jnp.bfloat16),
                    preferred_element_type=jnp.float32)
    quant_err = float(jnp.max(jnp.abs(pre16 - pre32)))
    assert quant_err <= 0.05 * float(jnp.max(jnp.abs(pre32))), quant_err

    fused16 = prepare_fused_params(params, SET_FEATURES, stream_dtype=jnp.bfloat16,
                                   tb_target=16, tk_target=256)
    x16 = x.astype(jnp.bfloat16)          # cast hoisted out of the forward call
    out16 = jax.block_until_ready(deepsets_forward(x16, fused16))
    ref16 = jax.block_until_ready(
        deepsets_reference(x, params, first_layer_dtype=jnp.bfloat16))
    assert jnp.allclose(out16, ref16, rtol=1e-2, atol=1e-2), (out16, ref16)

    print("KERNEL_OK")
</pallas_src>

<mosaic_0001>
module attributes {stable_mosaic.version = 11 : i64} {
  func.func @deepsets_kernel(%arg0: i32, %arg1: i32, %arg2: memref<16x256xf32, #tpu.memory_space<vmem>>, %arg3: memref<256x100xf32, #tpu.memory_space<vmem>>, %arg4: memref<1x100xf32, #tpu.memory_space<vmem>>, %arg5: memref<102x50xf32, #tpu.memory_space<vmem>>, %arg6: memref<102x50xf32, #tpu.memory_space<vmem>>, %arg7: memref<232x30xf32, #tpu.memory_space<vmem>>, %arg8: memref<31x10xf32, #tpu.memory_space<vmem>>, %arg9: memref<11x1xf32, #tpu.memory_space<vmem>>, %arg10: memref<16x1xf32, #tpu.memory_space<vmem>>, %arg11: memref<2x16x100xf32, #tpu.memory_space<vmem>>) attributes {dimension_semantics = [#tpu.dimension_semantics<arbitrary>, #tpu.dimension_semantics<arbitrary>], iteration_bounds = array<i64: 4, 2>, scalar_prefetch = 0 : i64, scratch_operands = 1 : i64, tpu.core_type = #tpu.core_type<tc>, window_params = [{transform_indices = @transform_0, window_bounds = array<i64: 16, 256>}, {transform_indices = @transform_1, window_bounds = array<i64: 256, 100>}, {pipeline_mode = #tpu.pipeline_mode<synchronous>, transform_indices = @transform_2, window_bounds = array<i64: 1, 100>}, {pipeline_mode = #tpu.pipeline_mode<synchronous>, transform_indices = @transform_3, window_bounds = array<i64: 102, 50>}, {pipeline_mode = #tpu.pipeline_mode<synchronous>, transform_indices = @transform_4, window_bounds = array<i64: 102, 50>}, {pipeline_mode = #tpu.pipeline_mode<synchronous>, transform_indices = @transform_5, window_bounds = array<i64: 232, 30>}, {pipeline_mode = #tpu.pipeline_mode<synchronous>, transform_indices = @transform_6, window_bounds = array<i64: 31, 10>}, {pipeline_mode = #tpu.pipeline_mode<synchronous>, transform_indices = @transform_7, window_bounds = array<i64: 11, 1>}, {transform_indices = @transform_8, window_bounds = array<i64: 16, 1>}]} {
    %c0_i32 = arith.constant 0 : i32
    %0 = arith.cmpi eq, %arg0, %c0_i32 : i32
    %1 = arith.extui %0 : i1 to i32
    %c0_i32_0 = arith.constant 0 : i32
    %2 = arith.cmpi ne, %1, %c0_i32_0 : i32
    scf.if %2 {
      %cst_9 = arith.constant 0.000000e+00 : f32
      %17 = vector.broadcast %cst_9 : f32 to vector<16x100xf32>
      %18 = arith.index_cast %arg1 : i32 to index
      %c0_10 = arith.constant 0 : index
      %c0_11 = arith.constant 0 : index
      %19 = vector.load %arg11[%18, %c0_10, %c0_11] : memref<2x16x100xf32, #tpu.memory_space<vmem>>, vector<1x16x100xf32>
      %20 = vector.shape_cast %19 : vector<1x16x100xf32> to vector<16x100xf32>
      %21 = vector.shape_cast %17 : vector<16x100xf32> to vector<1x16x100xf32>
      tpu.vector_store %arg11[%18, %c0_10, %c0_11], %21 {strides = array<i32>} : memref<2x16x100xf32, #tpu.memory_space<vmem>>, vector<1x16x100xf32>,
    } else {
    }
    %3 = arith.index_cast %arg1 : i32 to index
    %c0 = arith.constant 0 : index
    %c0_1 = arith.constant 0 : index
    %4 = vector.load %arg11[%3, %c0, %c0_1] : memref<2x16x100xf32, #tpu.memory_space<vmem>>, vector<1x16x100xf32>
    %5 = vector.shape_cast %4 : vector<1x16x100xf32> to vector<16x100xf32>
    %c0_2 = arith.constant 0 : index
    %c0_3 = arith.constant 0 : index
    %6 = vector.load %arg2[%c0_2, %c0_3] : memref<16x256xf32, #tpu.memory_space<vmem>>, vector<16x256xf32>
    %c0_4 = arith.constant 0 : index
    %c0_5 = arith.constant 0 : index
    %7 = vector.load %arg3[%c0_4, %c0_5] : memref<256x100xf32, #tpu.memory_space<vmem>>, vector<256x100xf32>
    %cst = arith.constant dense<0.000000e+00> : vector<16x100xf32>
    %8 = tpu.matmul %6, %7, %cst {dimension_numbers = #tpu.dot_dimension_numbers<[1], [0], [0], [1], [0, 0, 1, 1], [], []>} : vector<16x256xf32>, vector<256x100xf32>, vector<16x100xf32> -> vector<16x100xf32>
    %9 = arith.addf %5, %8 : vector<16x100xf32>
    %10 = arith.index_cast %arg1 : i32 to index
    %c0_6 = arith.constant 0 : index
    %c0_7 = arith.constant 0 : index
    %11 = vector.load %arg11[%10, %c0_6, %c0_7] : memref<2x16x100xf32, #tpu.memory_space<vmem>>, vector<1x16x100xf32>
    %12 = vector.shape_cast %11 : vector<1x16x100xf32> to vector<16x100xf32>
    %13 = vector.shape_cast %9 : vector<16x100xf32> to vector<1x16x100xf32>
    tpu.vector_store %arg11[%10, %c0_6, %c0_7], %13 {strides = array<i32>} : memref<2x16x100xf32, #tpu.memory_space<vmem>>, vector<1x16x100xf32>,
    %c3_i32 = arith.constant 3 : i32
    %14 = arith.cmpi eq, %arg0, %c3_i32 : i32
    %15 = arith.extui %14 : i1 to i32
    %c0_i32_8 = arith.constant 0 : i32
    %16 = arith.cmpi ne, %15, %c0_i32_8 : i32
    scf.if %16 {
      %c0_9 = arith.constant 0 : index
      %c0_10 = arith.constant 0 : index
      %17 = vector.load %arg5[%c0_9, %c0_10] : memref<102x50xf32, #tpu.memory_space<vmem>>, vector<102x50xf32>
      %18 = vector.extract_strided_slice %17 {offsets = [0, 0], sizes = [50, 50], strides = [1, 1]} : vector<102x50xf32> to vector<50x50xf32>
      %19 = vector.extract_strided_slice %17 {offsets = [50, 0], sizes = [50, 50], strides = [1, 1]} : vector<102x50xf32> to vector<50x50xf32>
      %20 = vector.extract_strided_slice %17 {offsets = [100, 0], sizes = [1, 50], strides = [1, 1]} : vector<102x50xf32> to vector<1x50xf32>
      %21 = vector.extract_strided_slice %17 {offsets = [101, 0], sizes = [1, 50], strides = [1, 1]} : vector<102x50xf32> to vector<1x50xf32>
      %c0_11 = arith.constant 0 : index
      %c0_12 = arith.constant 0 : index
      %22 = vector.load %arg6[%c0_11, %c0_12] : memref<102x50xf32, #tpu.memory_space<vmem>>, vector<102x50xf32>
      %23 = vector.extract_strided_slice %22 {offsets = [0, 0], sizes = [50, 50], strides = [1, 1]} : vector<102x50xf32> to vector<50x50xf32>
      %24 = vector.extract_strided_slice %22 {offsets = [50, 0], sizes = [50, 50], strides = [1, 1]} : vector<102x50xf32> to vector<50x50xf32>
      %25 = vector.extract_strided_slice %22 {offsets = [100, 0], sizes = [1, 50], strides = [1, 1]} : vector<102x50xf32> to vector<1x50xf32>
      %26 = vector.extract_strided_slice %22 {offsets = [101, 0], sizes = [1, 50], strides = [1, 1]} : vector<102x50xf32> to vector<1x50xf32>
      %c0_13 = arith.constant 0 : index
      %c0_14 = arith.constant 0 : index
      %27 = vector.load %arg7[%c0_13, %c0_14] : memref<232x30xf32, #tpu.memory_space<vmem>>, vector<232x30xf32>
      %28 = vector.extract_strided_slice %27 {offsets = [0, 0], sizes = [50, 30], strides = [1, 1]} : vector<232x30xf32> to vector<50x30xf32>
      %29 = vector.extract_strided_slice %27 {offsets = [50, 0], sizes = [50, 30], strides = [1, 1]} : vector<232x30xf32> to vector<50x30xf32>
      %30 = vector.extract_strided_slice %27 {offsets = [100, 0], sizes = [1, 30], strides = [1, 1]} : vector<232x30xf32> to vector<1x30xf32>
      %31 = vector.extract_strided_slice %27 {offsets = [101, 0], sizes = [30, 30], strides = [1, 1]} : vector<232x30xf32> to vector<30x30xf32>
      %32 = vector.extract_strided_slice %27 {offsets = [131, 0], sizes = [50, 30], strides = [1, 1]} : vector<232x30xf32> to vector<50x30xf32>
      %33 = vector.extract_strided_slice %27 {offsets = [181, 0], sizes = [50, 30], strides = [1, 1]} : vector<232x30xf32> to vector<50x30xf32>
      %34 = vector.extract_strided_slice %27 {offsets = [231, 0], sizes = [1, 30], strides = [1, 1]} : vector<232x30xf32> to vector<1x30xf32>
      %c0_15 = arith.constant 0 : index
      %c0_16 = arith.constant 0 : index
      %35 = vector.load %arg8[%c0_15, %c0_16] : memref<31x10xf32, #tpu.memory_space<vmem>>, vector<31x10xf32>
      %36 = vector.extract_strided_slice %35 {offsets = [0, 0], sizes = [30, 10], strides = [1, 1]} : vector<31x10xf32> to vector<30x10xf32>
      %37 = vector.extract_strided_slice %35 {offsets = [30, 0], sizes = [1, 10], strides = [1, 1]} : vector<31x10xf32> to vector<1x10xf32>
      %c0_17 = arith.constant 0 : index
      %c0_18 = arith.constant 0 : index
      %38 = vector.load %arg9[%c0_17, %c0_18] : memref<11x1xf32, #tpu.memory_space<vmem>>, vector<11x1xf32>
      %39 = vector.extract_strided_slice %38 {offsets = [0, 0], sizes = [10, 1], strides = [1, 1]} : vector<11x1xf32> to vector<10x1xf32>
      %40 = vector.extract_strided_slice %38 {offsets = [10, 0], sizes = [1, 1], strides = [1, 1]} : vector<11x1xf32> to vector<1x1xf32>
      %41 = arith.index_cast %arg1 : i32 to index
      %c0_19 = arith.constant 0 : index
      %c0_20 = arith.constant 0 : index
      %42 = vector.load %arg11[%41, %c0_19, %c0_20] : memref<2x16x100xf32, #tpu.memory_space<vmem>>, vector<1x16x100xf32>
      %43 = vector.shape_cast %42 : vector<1x16x100xf32> to vector<16x100xf32>
      %c0_21 = arith.constant 0 : index
      %c0_22 = arith.constant 0 : index
      %44 = vector.load %arg4[%c0_21, %c0_22] : memref<1x100xf32, #tpu.memory_space<vmem>>, vector<1x100xf32>
      %45 = vector.broadcast %44 : vector<1x100xf32> to vector<16x100xf32>
      %46 = arith.addf %43, %45 : vector<16x100xf32>
      %47 = vector.extract_strided_slice %46 {offsets = [0, 0], sizes = [16, 50], strides = [1, 1]} : vector<16x100xf32> to vector<16x50xf32>
      %48 = vector.extract_strided_slice %46 {offsets = [0, 50], sizes = [16, 50], strides = [1, 1]} : vector<16x100xf32> to vector<16x50xf32>
      %cst_23 = arith.constant 0.000000e+00 : f32
      %49 = vector.broadcast %cst_23 : f32 to vector<16x50xf32>
      %50 = arith.cmpf ogt, %47, %49 : vector<16x50xf32>
      %cst_24 = arith.constant 0.000000e+00 : f32
      %51 = vector.broadcast %cst_24 : f32 to vector<16x50xf32>
      %52 = arith.minimumf %47, %51 : vector<16x50xf32>
      %53 = math.exp %52 : vector<16x50xf32>
      %cst_25 = arith.constant 1.000000e+00 : f32
      %54 = vector.broadcast %cst_25 : f32 to vector<16x50xf32>
      %55 = arith.subf %53, %54 : vector<16x50xf32>
      %56 = arith.select %50, %47, %55 : vector<16x50xi1>, vector<16x50xf32>
      %cst_26 = arith.constant dense<0.000000e+00> : vector<16x50xf32>
      %57 = tpu.matmul %56, %18, %cst_26 {dimension_numbers = #tpu.dot_dimension_numbers<[1], [0], [0], [1], [0, 0, 1, 1], [], []>} : vector<16x50xf32>, vector<50x50xf32>, vector<16x50xf32> -> vector<16x50xf32>
      %58 = vector.broadcast %20 : vector<1x50xf32> to vector<16x50xf32>
      %59 = arith.addf %57, %58 : vector<16x50xf32>
      %cst_27 = arith.constant 0.000000e+00 : f32
      %60 = vector.broadcast %cst_27 : f32 to vector<16x50xf32>
      %61 = arith.cmpf ogt, %59, %60 : vector<16x50xf32>
      %cst_28 = arith.constant 0.000000e+00 : f32
      %62 = vector.broadcast %cst_28 : f32 to vector<16x50xf32>
      %63 = arith.minimumf %59, %62 : vector<16x50xf32>
      %64 = math.exp %63 : vector<16x50xf32>
      %cst_29 = arith.constant 1.000000e+00 : f32
      %65 = vector.broadcast %cst_29 : f32 to vector<16x50xf32>
      %66 = arith.subf %64, %65 : vector<16x50xf32>
      %67 = arith.select %61, %59, %66 : vector<16x50xi1>, vector<16x50xf32>
      %cst_30 = arith.constant dense<0.000000e+00> : vector<16x50xf32>
      %68 = tpu.matmul %67, %23, %cst_30 {dimension_numbers = #tpu.dot_dimension_numbers<[1], [0], [0], [1], [0, 0, 1, 1], [], []>} : vector<16x50xf32>, vector<50x50xf32>, vector<16x50xf32> -> vector<16x50xf32>
      %69 = vector.broadcast %25 : vector<1x50xf32> to vector<16x50xf32>
      %70 = arith.addf %68, %69 : vector<16x50xf32>
      %cst_31 = arith.constant 0.000000e+00 : f32
      %71 = vector.broadcast %cst_31 : f32 to vector<16x50xf32>
      %72 = arith.maximumf %48, %71 : vector<16x50xf32>
      %cst_32 = arith.constant dense<0.000000e+00> : vector<16x50xf32>
      %73 = tpu.matmul %72, %19, %cst_32 {dimension_numbers = #tpu.dot_dimension_numbers<[1], [0], [0], [1], [0, 0, 1, 1], [], []>} : vector<16x50xf32>, vector<50x50xf32>, vector<16x50xf32> -> vector<16x50xf32>
      %74 = vector.broadcast %21 : vector<1x50xf32> to vector<16x50xf32>
      %75 = arith.addf %73, %74 : vector<16x50xf32>
      %cst_33 = arith.constant 0.000000e+00 : f32
      %76 = vector.broadcast %cst_33 : f32 to vector<16x50xf32>
      %77 = arith.maximumf %75, %76 : vector<16x50xf32>
      %cst_34 = arith.constant dense<0.000000e+00> : vector<16x50xf32>
      %78 = tpu.matmul %77, %24, %cst_34 {dimension_numbers = #tpu.dot_dimension_numbers<[1], [0], [0], [1], [0, 0, 1, 1], [], []>} : vector<16x50xf32>, vector<50x50xf32>, vector<16x50xf32> -> vector<16x50xf32>
      %79 = vector.broadcast %26 : vector<1x50xf32> to vector<16x50xf32>
      %80 = arith.addf %78, %79 : vector<16x50xf32>
      %cst_35 = arith.constant 0.000000e+00 : f32
      %81 = vector.broadcast %cst_35 : f32 to vector<16x50xf32>
      %82 = arith.maximumf %80, %81 : vector<16x50xf32>
      %cst_36 = arith.constant 1.000000e-03 : f32
      %83 = vector.broadcast %cst_36 : f32 to vector<16x50xf32>
      %84 = arith.addf %82, %83 : vector<16x50xf32>
      %85 = math.log %84 : vector<16x50xf32>
      %cst_37 = arith.constant dense<0.000000e+00> : vector<16x30xf32>
      %86 = tpu.matmul %70, %28, %cst_37 {dimension_numbers = #tpu.dot_dimension_numbers<[1], [0], [0], [1], [0, 0, 1, 1], [], []>} : vector<16x50xf32>, vector<50x30xf32>, vector<16x30xf32> -> vector<16x30xf32>
      %cst_38 = arith.constant dense<0.000000e+00> : vector<16x30xf32>
      %87 = tpu.matmul %85, %29, %cst_38 {dimension_numbers = #tpu.dot_dimension_numbers<[1], [0], [0], [1], [0, 0, 1, 1], [], []>} : vector<16x50xf32>, vector<50x30xf32>, vector<16x30xf32> -> vector<16x30xf32>
      %88 = arith.addf %86, %87 : vector<16x30xf32>
      %89 = vector.broadcast %30 : vector<1x30xf32> to vector<16x30xf32>
      %90 = arith.addf %88, %89 : vector<16x30xf32>
      %cst_39 = arith.constant 0.000000e+00 : f32
      %91 = vector.broadcast %cst_39 : f32 to vector<16x50xf32>
      %92 = arith.maximumf %70, %91 : vector<16x50xf32>
      %cst_40 = arith.constant 1.000000e-03 : f32
      %93 = vector.broadcast %cst_40 : f32 to vector<16x50xf32>
      %94 = arith.addf %92, %93 : vector<16x50xf32>
      %cst_41 = arith.constant 0.000000e+00 : f32
      %95 = vector.broadcast %cst_41 : f32 to vector<16x50xf32>
      %96 = arith.maximumf %85, %95 : vector<16x50xf32>
      %cst_42 = arith.constant 1.000000e-03 : f32
      %97 = vector.broadcast %cst_42 : f32 to vector<16x50xf32>
      %98 = arith.addf %96, %97 : vector<16x50xf32>
      %cst_43 = arith.constant 0.000000e+00 : f32
      %99 = vector.broadcast %cst_43 : f32 to vector<16x30xf32>
      %100 = arith.cmpf ogt, %90, %99 : vector<16x30xf32>
      %cst_44 = arith.constant 0.000000e+00 : f32
      %101 = vector.broadcast %cst_44 : f32 to vector<16x30xf32>
      %102 = arith.minimumf %90, %101 : vector<16x30xf32>
      %103 = math.exp %102 : vector<16x30xf32>
      %cst_45 = arith.constant 1.000000e+00 : f32
      %104 = vector.broadcast %cst_45 : f32 to vector<16x30xf32>
      %105 = arith.subf %103, %104 : vector<16x30xf32>
      %106 = arith.select %100, %90, %105 : vector<16x30xi1>, vector<16x30xf32>
      %cst_46 = arith.constant 0.000000e+00 : f32
      %107 = vector.broadcast %cst_46 : f32 to vector<16x50xf32>
      %108 = arith.cmpf ogt, %94, %107 : vector<16x50xf32>
      %cst_47 = arith.constant 0.000000e+00 : f32
      %109 = vector.broadcast %cst_47 : f32 to vector<16x50xf32>
      %110 = arith.minimumf %94, %109 : vector<16x50xf32>
      %111 = math.exp %110 : vector<16x50xf32>
      %cst_48 = arith.constant 1.000000e+00 : f32
      %112 = vector.broadcast %cst_48 : f32 to vector<16x50xf32>
      %113 = arith.subf %111, %112 : vector<16x50xf32>
      %114 = arith.select %108, %94, %113 : vector<16x50xi1>, vector<16x50xf32>
      %cst_49 = arith.constant 0.000000e+00 : f32
      %115 = vector.broadcast %cst_49 : f32 to vector<16x50xf32>
      %116 = arith.cmpf ogt, %98, %115 : vector<16x50xf32>
      %cst_50 = arith.constant 0.000000e+00 : f32
      %117 = vector.broadcast %cst_50 : f32 to vector<16x50xf32>
      %118 = arith.minimumf %98, %117 : vector<16x50xf32>
      %119 = math.exp %118 : vector<16x50xf32>
      %cst_51 = arith.constant 1.000000e+00 : f32
      %120 = vector.broadcast %cst_51 : f32 to vector<16x50xf32>
      %121 = arith.subf %119, %120 : vector<16x50xf32>
      %122 = arith.select %116, %98, %121 : vector<16x50xi1>, vector<16x50xf32>
      %cst_52 = arith.constant dense<0.000000e+00> : vector<16x30xf32>
      %123 = tpu.matmul %106, %31, %cst_52 {dimension_numbers = #tpu.dot_dimension_numbers<[1], [0], [0], [1], [0, 0, 1, 1], [], []>} : vector<16x30xf32>, vector<30x30xf32>, vector<16x30xf32> -> vector<16x30xf32>
      %cst_53 = arith.constant dense<0.000000e+00> : vector<16x30xf32>
      %124 = tpu.matmul %114, %32, %cst_53 {dimension_numbers = #tpu.dot_dimension_numbers<[1], [0], [0], [1], [0, 0, 1, 1], [], []>} : vector<16x50xf32>, vector<50x30xf32>, vector<16x30xf32> -> vector<16x30xf32>
      %125 = arith.addf %123, %124 : vector<16x30xf32>
      %cst_54 = arith.constant dense<0.000000e+00> : vector<16x30xf32>
      %126 = tpu.matmul %122, %33, %cst_54 {dimension_numbers = #tpu.dot_dimension_numbers<[1], [0], [0], [1], [0, 0, 1, 1], [], []>} : vector<16x50xf32>, vector<50x30xf32>, vector<16x30xf32> -> vector<16x30xf32>
      %127 = arith.addf %125, %126 : vector<16x30xf32>
      %128 = vector.broadcast %34 : vector<1x30xf32> to vector<16x30xf32>
      %129 = arith.addf %127, %128 : vector<16x30xf32>
      %cst_55 = arith.constant 0.000000e+00 : f32
      %130 = vector.broadcast %cst_55 : f32 to vector<16x30xf32>
      %131 = arith.cmpf ogt, %129, %130 : vector<16x30xf32>
      %cst_56 = arith.constant 0.000000e+00 : f32
      %132 = vector.broadcast %cst_56 : f32 to vector<16x30xf32>
      %133 = arith.minimumf %129, %132 : vector<16x30xf32>
      %134 = math.exp %133 : vector<16x30xf32>
      %cst_57 = arith.constant 1.000000e+00 : f32
      %135 = vector.broadcast %cst_57 : f32 to vector<16x30xf32>
      %136 = arith.subf %134, %135 : vector<16x30xf32>
      %137 = arith.select %131, %129, %136 : vector<16x30xi1>, vector<16x30xf32>
      %cst_58 = arith.constant dense<0.000000e+00> : vector<16x10xf32>
      %138 = tpu.matmul %137, %36, %cst_58 {dimension_numbers = #tpu.dot_dimension_numbers<[1], [0], [0], [1], [0, 0, 1, 1], [], []>} : vector<16x30xf32>, vector<30x10xf32>, vector<16x10xf32> -> vector<16x10xf32>
      %139 = vector.broadcast %37 : vector<1x10xf32> to vector<16x10xf32>
      %140 = arith.addf %138, %139 : vector<16x10xf32>
      %cst_59 = arith.constant 0.000000e+00 : f32
      %141 = vector.broadcast %cst_59 : f32 to vector<16x10xf32>
      %142 = arith.cmpf ogt, %140, %141 : vector<16x10xf32>
      %cst_60 = arith.constant 0.000000e+00 : f32
      %143 = vector.broadcast %cst_60 : f32 to vector<16x10xf32>
      %144 = arith.minimumf %140, %143 : vector<16x10xf32>
      %145 = math.exp %144 : vector<16x10xf32>
      %cst_61 = arith.constant 1.000000e+00 : f32
      %146 = vector.broadcast %cst_61 : f32 to vector<16x10xf32>
      %147 = arith.subf %145, %146 : vector<16x10xf32>
      %148 = arith.select %142, %140, %147 : vector<16x10xi1>, vector<16x10xf32>
      %cst_62 = arith.constant dense<0.000000e+00> : vector<16x1xf32>
      %149 = tpu.matmul %148, %39, %cst_62 {dimension_numbers = #tpu.dot_dimension_numbers<[1], [0], [0], [1], [0, 0, 1, 1], [], []>} : vector<16x10xf32>, vector<10x1xf32>, vector<16x1xf32> -> vector<16x1xf32>
      %150 = vector.broadcast %40 : vector<1x1xf32> to vector<16x1xf32>
      %151 = arith.addf %149, %150 : vector<16x1xf32>
      %c0_63 = arith.constant 0 : index
      %c0_64 = arith.constant 0 : index
      %152 = vector.load %arg10[%c0_63, %c0_64] : memref<16x1xf32, #tpu.memory_space<vmem>>, vector<16x1xf32>
      tpu.vector_store %arg10[%c0_63, %c0_64], %151 {strides = array<i32>} : memref<16x1xf32, #tpu.memory_space<vmem>>, vector<16x1xf32>,
    } else {
    }
    return
  }
  func.func @transform_0(%arg0: i32, %arg1: i32) -> (i32, i32) {
    %c0_i32 = arith.constant 0 : i32
    return %arg1, %arg0 : i32, i32
  }
  func.func @transform_1(%arg0: i32, %arg1: i32) -> (i32, i32) {
    %c0_i32 = arith.constant 0 : i32
    %c0_i32_0 = arith.constant 0 : i32
    return %arg0, %c0_i32 : i32, i32
  }
  func.func @transform_2(%arg0: i32, %arg1: i32) -> (i32, i32) {
    %c0_i32 = arith.constant 0 : i32
    %c0_i32_0 = arith.constant 0 : i32
    %c0_i32_1 = arith.constant 0 : i32
    return %c0_i32, %c0_i32_0 : i32, i32
  }
  func.func @transform_3(%arg0: i32, %arg1: i32) -> (i32, i32) {
    %c0_i32 = arith.constant 0 : i32
    %c0_i32_0 = arith.constant 0 : i32
    %c0_i32_1 = arith.constant 0 : i32
    return %c0_i32, %c0_i32_0 : i32, i32
  }
  func.func @transform_4(%arg0: i32, %arg1: i32) -> (i32, i32) {
    %c0_i32 = arith.constant 0 : i32
    %c0_i32_0 = arith.constant 0 : i32
    %c0_i32_1 = arith.constant 0 : i32
    return %c0_i32, %c0_i32_0 : i32, i32
  }
  func.func @transform_5(%arg0: i32, %arg1: i32) -> (i32, i32) {
    %c0_i32 = arith.constant 0 : i32
    %c0_i32_0 = arith.constant 0 : i32
    %c0_i32_1 = arith.constant 0 : i32
    return %c0_i32, %c0_i32_0 : i32, i32
  }
  func.func @transform_6(%arg0: i32, %arg1: i32) -> (i32, i32) {
    %c0_i32 = arith.constant 0 : i32
    %c0_i32_0 = arith.constant 0 : i32
    %c0_i32_1 = arith.constant 0 : i32
    return %c0_i32, %c0_i32_0 : i32, i32
  }
  func.func @transform_7(%arg0: i32, %arg1: i32) -> (i32, i32) {
    %c0_i32 = arith.constant 0 : i32
    %c0_i32_0 = arith.constant 0 : i32
    %c0_i32_1 = arith.constant 0 : i32
    return %c0_i32, %c0_i32_0 : i32, i32
  }
  func.func @transform_8(%arg0: i32, %arg1: i32) -> (i32, i32) {
    %c0_i32 = arith.constant 0 : i32
    %c0_i32_0 = arith.constant 0 : i32
    return %arg1, %c0_i32 : i32, i32
  }
}

</mosaic_0001>

<llo_original>
// kernel: tpu_custom_call.1
$region0: #{tpu_custom_call.1}
  #allocation0 [shape = 'u32[]', space=smem, size = 0x4, offset = 0x4, fixed_abs, tag = 'smem constant byte address 0x4 - core index']
  #allocation1 [shape = 'u32[144,128]{1,0:T(1,128)}', space=vmem, size = 0x12000, scoped, tag = 'internal scratch']
  #allocation2 [shape = 'f32[2,16,100]{2,1,0:T(8,128)}', space=vmem, size = 0x4000, scoped, tag = 'scratch operand']
  %s0 = inlined_call_operand.vmem [shape: f32[32,1024], index: 0, kind: input, shape index: {}]
  %s1 = inlined_call_operand.vmem [shape: f32[1024,100], index: 1, kind: input, shape index: {}]
  %s2 = inlined_call_operand.vmem [shape: f32[1,100], index: 2, kind: input, shape index: {}]
  %s3 = inlined_call_operand.vmem [shape: f32[102,50], index: 3, kind: input, shape index: {}]
  %s4 = inlined_call_operand.vmem [shape: f32[102,50], index: 4, kind: input, shape index: {}]
  %s5 = inlined_call_operand.vmem [shape: f32[232,30], index: 5, kind: input, shape index: {}]
  %s6 = inlined_call_operand.vmem [shape: f32[31,10], index: 6, kind: input, shape index: {}]
  %s7 = inlined_call_operand.vmem [shape: f32[11,1], index: 7, kind: input, shape index: {}]
  %s8 = inlined_call_operand.vmem [shape: f32[32,1], index: 8, kind: output, shape index: {}]
  %s9 = sld [smem:[#allocation0]]
  $region96: #{tpu_custom_call.1} parent=0
    _
  %s11 = ssub.s32 1, %s9
  %s12 = scalar_select 0, %s11, %s9
  $region1: #{tpu_custom_call.1} parent=0
    #allocation3 [shape = 'u8[32768]{0}', space=vmem, size = 0x8000, scoped, tag = 'input window, operand 0']
    loop: start=0, step=1, limit=10
    $region2: #{tpu_custom_call.1} parent=1 // loop_pre_header
      _
    $region3: #{tpu_custom_call.1} parent=1 // loop_header
      %s14 = sphi 0, %s18
      %p15 = scmp.ge.s32.totalorder %s14, 10
      %s21 = sphi 0, %s33
      %s22 = sphi 0, %s29
      %s23 = sphi 0, %s21
      %s24 = sphi 0, %s22
      %s25 = sphi 0, %s23
      %s26 = sphi 0, %s24
      %s38 = sphi 0, %s40
      %s41 = sphi 0, %s38
      %s42 = sphi 0, %s41
      %s58 = sphi 0, %s42
      %s64 = sphi 0, %s66
      %s67 = sphi 0, %s64
      %s68 = sphi 0, %s67
      %s84 = sphi 0, %s68
      %s88 = sphi 0, %s88
      %s90 = sphi 0, %s88
      %s91 = sphi 0, %s90
      %s105 = sphi 0, %s91
      %s109 = sphi 0, %s109
      %s111 = sphi 0, %s109
      %s112 = sphi 0, %s111
      %s126 = sphi 0, %s112
      %s130 = sphi 0, %s130
      %s132 = sphi 0, %s130
      %s133 = sphi 0, %s132
      %s147 = sphi 0, %s133
      %s151 = sphi 0, %s151
      %s153 = sphi 0, %s151
      %s154 = sphi 0, %s153
      %s168 = sphi 0, %s154
      %s172 = sphi 0, %s172
      %s174 = sphi 0, %s172
      %s175 = sphi 0, %s174
      %s189 = sphi 0, %s175
      %s193 = sphi 0, %s193
      %s195 = sphi 0, %s193
      %s196 = sphi 0, %s195
      %s210 = sphi 0, %s196
      %s216 = sphi 0, %s218
      %s219 = sphi 0, %s216
      %s220 = sphi 0, %s219
      %s236 = sphi 0, %s220
    $region4: #{tpu_custom_call.1} parent=1 // loop_header_branch
      %17 = sbr.rel (%p15) target = $region8
    $region5: #{tpu_custom_call.1} parent=1 // loop_body
      %s19 = ssub.s32 %s14, 1
      %s20 = ssub.s32 %s14, 2
      %s27 = sadd.s32 1, %s22
      %p28 = scmp.ge.s32.totalorder %s27, 2
      %s29 = scalar_select %p28, 0, %s27
      %s30 = sadd.s32 1, %s21
      %s31 = scalar_select %p28, %s30, %s21
      %p32 = scmp.ge.s32.totalorder %s31, 4
      %s33 = scalar_select %p32, 0, %s31
      %s34 = ssub.s32 %s22, %s29
      %s35 = ssub.s32 %s21, %s33
      %s36 = sor.u32 %s34, %s35
      %p37 = scmp.eq.s32.totalorder %s36, 0
      %s39 = sadd.s32 %s38, 1
      %s40 = scalar_select %p37, %s38, %s39
      %p43 = pneg %p37
      %p44 = scmp.eq.s32.totalorder %s14, 7
      %p45 = por %p43, %p44
      %p46 = scmp.ne.s32.totalorder %s38, %s41
      %p47 = scmp.eq.s32.totalorder %s14, 0
      %p48 = por %p46, %p47
      %p49 = scmp.ne.s32.totalorder %s38, %s41
      %p50 = scmp.eq.s32.totalorder %s19, 7
      %p51 = por %p49, %p50
      %p52 = scmp.ne.s32.totalorder %s41, %s42
      %p53 = scmp.eq.s32.totalorder %s19, 0
      %p54 = por %p52, %p53
      %p55 = scmp.ne.s32.totalorder %s41, %s42
      %p56 = scmp.eq.s32.totalorder %s20, 7
      %p57 = por %p55, %p56
      %p59 = scmp.ne.s32.totalorder %s42, %s58
      %p60 = scmp.eq.s32.totalorder %s20, 0
      %p61 = por %p59, %p60
      %s62 = ssub.s32 %s21, %s33
      %p63 = scmp.eq.s32.totalorder %s62, 0
      %s65 = sadd.s32 %s64, 1
      %s66 = scalar_select %p63, %s64, %s65
      %p69 = pneg %p63
      %p70 = scmp.eq.s32.totalorder %s14, 7
      %p71 = por %p69, %p70
      %p72 = scmp.ne.s32.totalorder %s64, %s67
      %p73 = scmp.eq.s32.totalorder %s14, 0
      %p74 = por %p72, %p73
      %p75 = scmp.ne.s32.totalorder %s64, %s67
      %p76 = scmp.eq.s32.totalorder %s19, 7
      %p77 = por %p75, %p76
      %p78 = scmp.ne.s32.totalorder %s67, %s68
      %p79 = scmp.eq.s32.totalorder %s19, 0
      %p80 = por %p78, %p79
      %p81 = scmp.ne.s32.totalorder %s67, %s68
      %p82 = scmp.eq.s32.totalorder %s20, 7
      %p83 = por %p81, %p82
      %p85 = scmp.ne.s32.totalorder %s68, %s84
      %p86 = scmp.eq.s32.totalorder %s20, 0
      %p87 = por %p85, %p86
      %s89 = sadd.s32 %s88, 1
      %p92 = scmp.eq.s32.totalorder %s14, 7
      %p93 = scmp.ne.s32.totalorder %s88, %s90
      %p94 = scmp.eq.s32.totalorder %s14, 0
      %p95 = por %p93, %p94
      %p96 = scmp.ne.s32.totalorder %s88, %s90
      %p97 = scmp.eq.s32.totalorder %s19, 7
      %p98 = por %p96, %p97
      %p99 = scmp.ne.s32.totalorder %s90, %s91
      %p100 = scmp.eq.s32.totalorder %s19, 0
      %p101 = por %p99, %p100
      %p102 = scmp.ne.s32.totalorder %s90, %s91
      %p103 = scmp.eq.s32.totalorder %s20, 7
      %p104 = por %p102, %p103
      %p106 = scmp.ne.s32.totalorder %s91, %s105
      %p107 = scmp.eq.s32.totalorder %s20, 0
      %p108 = por %p106, %p107
      %s110 = sadd.s32 %s109, 1
      %p113 = scmp.eq.s32.totalorder %s14, 7
      %p114 = scmp.ne.s32.totalorder %s109, %s111
      %p115 = scmp.eq.s32.totalorder %s14, 0
      %p116 = por %p114, %p115
      %p117 = scmp.ne.s32.totalorder %s109, %s111
      %p118 = scmp.eq.s32.totalorder %s19, 7
      %p119 = por %p117, %p118
      %p120 = scmp.ne.s32.totalorder %s111, %s112
      %p121 = scmp.eq.s32.totalorder %s19, 0
      %p122 = por %p120, %p121
      %p123 = scmp.ne.s32.totalorder %s111, %s112
      %p124 = scmp.eq.s32.totalorder %s20, 7
      %p125 = por %p123, %p124
      %p127 = scmp.ne.s32.totalorder %s112, %s126
      %p128 = scmp.eq.s32.totalorder %s20, 0
      %p129 = por %p127, %p128
      %s131 = sadd.s32 %s130, 1
      %p134 = scmp.eq.s32.totalorder %s14, 7
      %p135 = scmp.ne.s32.totalorder %s130, %s132
      %p136 = scmp.eq.s32.totalorder %s14, 0
      %p137 = por %p135, %p136
      %p138 = scmp.ne.s32.totalorder %s130, %s132
      %p139 = scmp.eq.s32.totalorder %s19, 7
      %p140 = por %p138, %p139
      %p141 = scmp.ne.s32.totalorder %s132, %s133
      %p142 = scmp.eq.s32.totalorder %s19, 0
      %p143 = por %p141, %p142
      %p144 = scmp.ne.s32.totalorder %s132, %s133
      %p145 = scmp.eq.s32.totalorder %s20, 7
      %p146 = por %p144, %p145
      %p148 = scmp.ne.s32.totalorder %s133, %s147
      %p149 = scmp.eq.s32.totalorder %s20, 0
      %p150 = por %p148, %p149
      %s152 = sadd.s32 %s151, 1
      %p155 = scmp.eq.s32.totalorder %s14, 7
      %p156 = scmp.ne.s32.totalorder %s151, %s153
      %p157 = scmp.eq.s32.totalorder %s14, 0
      %p158 = por %p156, %p157
      %p159 = scmp.ne.s32.totalorder %s151, %s153
      %p160 = scmp.eq.s32.totalorder %s19, 7
      %p161 = por %p159, %p160
      %p162 = scmp.ne.s32.totalorder %s153, %s154
      %p163 = scmp.eq.s32.totalorder %s19, 0
      %p164 = por %p162, %p163
      %p165 = scmp.ne.s32.totalorder %s153, %s154
      %p166 = scmp.eq.s32.totalorder %s20, 7
      %p167 = por %p165, %p166
      %p169 = scmp.ne.s32.totalorder %s154, %s168
      %p170 = scmp.eq.s32.totalorder %s20, 0
      %p171 = por %p169, %p170
      %s173 = sadd.s32 %s172, 1
      %p176 = scmp.eq.s32.totalorder %s14, 7
      %p177 = scmp.ne.s32.totalorder %s172, %s174
      %p178 = scmp.eq.s32.totalorder %s14, 0
      %p179 = por %p177, %p178
      %p180 = scmp.ne.s32.totalorder %s172, %s174
      %p181 = scmp.eq.s32.totalorder %s19, 7
      %p182 = por %p180, %p181
      %p183 = scmp.ne.s32.totalorder %s174, %s175
      %p184 = scmp.eq.s32.totalorder %s19, 0
      %p185 = por %p183, %p184
      %p186 = scmp.ne.s32.totalorder %s174, %s175
      %p187 = scmp.eq.s32.totalorder %s20, 7
      %p188 = por %p186, %p187
      %p190 = scmp.ne.s32.totalorder %s175, %s189
      %p191 = scmp.eq.s32.totalorder %s20, 0
      %p192 = por %p190, %p191
      %s194 = sadd.s32 %s193, 1
      %p197 = scmp.eq.s32.totalorder %s14, 7
      %p198 = scmp.ne.s32.totalorder %s193, %s195
      %p199 = scmp.eq.s32.totalorder %s14, 0
      %p200 = por %p198, %p199
      %p201 = scmp.ne.s32.totalorder %s193, %s195
      %p202 = scmp.eq.s32.totalorder %s19, 7
      %p203 = por %p201, %p202
      %p204 = scmp.ne.s32.totalorder %s195, %s196
      %p205 = scmp.eq.s32.totalorder %s19, 0
      %p206 = por %p204, %p205
      %p207 = scmp.ne.s32.totalorder %s195, %s196
      %p208 = scmp.eq.s32.totalorder %s20, 7
      %p209 = por %p207, %p208
      %p211 = scmp.ne.s32.totalorder %s196, %s210
      %p212 = scmp.eq.s32.totalorder %s20, 0
      %p213 = por %p211, %p212
      %s214 = ssub.s32 %s22, %s29
      %p215 = scmp.eq.s32.totalorder %s214, 0
      %s217 = sadd.s32 %s216, 1
      %s218 = scalar_select %p215, %s216, %s217
      %p221 = pneg %p215
      %p222 = scmp.eq.s32.totalorder %s14, 7
      %p223 = por %p221, %p222
      %p224 = scmp.ne.s32.totalorder %s216, %s219
      %p225 = scmp.eq.s32.totalorder %s14, 0
      %p226 = por %p224, %p225
      %p227 = scmp.ne.s32.totalorder %s216, %s219
      %p228 = scmp.eq.s32.totalorder %s19, 7
      %p229 = por %p227, %p228
      %p230 = scmp.ne.s32.totalorder %s219, %s220
      %p231 = scmp.eq.s32.totalorder %s19, 0
      %p232 = por %p230, %p231
      %p233 = scmp.ne.s32.totalorder %s219, %s220
      %p234 = scmp.eq.s32.totalorder %s20, 7
      %p235 = por %p233, %p234
      %p237 = scmp.ne.s32.totalorder %s220, %s236
      %p238 = scmp.eq.s32.totalorder %s20, 0
      %p239 = por %p237, %p238
      %p240 = scmp.le.s32.totalorder 1, %s14
      %p241 = scmp.lt.s32.totalorder %s14, 9
      %p242 = pnand %p240, %p241
      %p243 = pneg %p242
      // Predicated region
      $region9: #{tpu_custom_call.1} parent=5 // pred_check
        _
      $region10: #{tpu_custom_call.1} parent=5 // pred_check_branch
        %245 = sbr.rel (%p242) target = $region12
      $region11: #{tpu_custom_call.1} parent=5 // pred_region
        %s246 = ssub.s32 %s14, 1
        // Predicated region
        $region13: #{tpu_custom_call.1} parent=11 // pred_check
          %p247 = pneg %p101
        $region14: #{tpu_custom_call.1} parent=11 // pred_check_branch
          %249 = sbr.rel (%p247) target = $region16
        $region15: #{tpu_custom_call.1} parent=11 // pred_region
          _
        $region16: #{tpu_custom_call.1} parent=11 // pred_fallthru
          _
        // Predicated region
        $region17: #{tpu_custom_call.1} parent=11 // pred_check
          %p250 = pneg %p122
        $region18: #{tpu_custom_call.1} parent=11 // pred_check_branch
          %252 = sbr.rel (%p250) target = $region20
        $region19: #{tpu_custom_call.1} parent=11 // pred_region
          _
        $region20: #{tpu_custom_call.1} parent=11 // pred_fallthru
          _
        // Predicated region
        $region21: #{tpu_custom_call.1} parent=11 // pred_check
          %p253 = pneg %p143
        $region22: #{tpu_custom_call.1} parent=11 // pred_check_branch
          %255 = sbr.rel (%p253) target = $region24
        $region23: #{tpu_custom_call.1} parent=11 // pred_region
          _
        $region24: #{tpu_custom_call.1} parent=11 // pred_fallthru
          _
        // Predicated region
        $region25: #{tpu_custom_call.1} parent=11 // pred_check
          %p256 = pneg %p164
        $region26: #{tpu_custom_call.1} parent=11 // pred_check_branch
          %258 = sbr.rel (%p256) target = $region28
        $region27: #{tpu_custom_call.1} parent=11 // pred_region
          _
        $region28: #{tpu_custom_call.1} parent=11 // pred_fallthru
          _
        // Predicated region
        $region29: #{tpu_custom_call.1} parent=11 // pred_check
          %p259 = pneg %p185
        $region30: #{tpu_custom_call.1} parent=11 // pred_check_branch
          %261 = sbr.rel (%p259) target = $region32
        $region31: #{tpu_custom_call.1} parent=11 // pred_region
          _
        $region32: #{tpu_custom_call.1} parent=11 // pred_fallthru
          _
        // Predicated region
        $region33: #{tpu_custom_call.1} parent=11 // pred_check
          %p262 = pneg %p206
        $region34: #{tpu_custom_call.1} parent=11 // pred_check_branch
          %264 = sbr.rel (%p262) target = $region36
        $region35: #{tpu_custom_call.1} parent=11 // pred_region
          _
        $region36: #{tpu_custom_call.1} parent=11 // pred_fallthru
          _
      $region12: #{tpu_custom_call.1} parent=5 // pred_fallthru
        _
      %p265 = scmp.lt.s32.totalorder %s14, 8
      // Predicated region
      $region37: #{tpu_custom_call.1} parent=5 // pred_check
        %p266 = pneg %p265
      $region38: #{tpu_custom_call.1} parent=5 // pred_check_branch
        %268 = sbr.rel (%p266) target = $region40
      $region39: #{tpu_custom_call.1} parent=5 // pred_region
        // Predicated region
        $region41: #{tpu_custom_call.1} parent=39 // pred_check
          %p269 = pneg %p48
        $region42: #{tpu_custom_call.1} parent=39 // pred_check_branch
          %271 = sbr.rel (%p269) target = $region44
        $region43: #{tpu_custom_call.1} parent=39 // pred_region
          %s272 = sand.u32 %s38, 1
          %s273 = sand.u32 %s38, 1
          %s274 = smul.addr %s273, 32
          %s275 = scalar_lea.vmem [#allocation3], %s274
          %s276 = smul.u32 2, %s22
          %s277 = smul.u32 2, %s21
          %s278 = smul.addr %s276, 8
          %s279 = sadd.s32 %s277, %s278
          %s280 = smul.addr %s279, 8
          %s281 = scalar_lea.vmem %s0, %s280
          // Predicated region
          $region45: #{tpu_custom_call.1} parent=43 // pred_check
            _
          $region46: #{tpu_custom_call.1} parent=43 // pred_check_branch
            %283 = sbr.rel (0) target = $region48
          $region47: #{tpu_custom_call.1} parent=43 // pred_region
            // Predicated region
            $region49: #{tpu_custom_call.1} parent=47 // pred_check
              _
            $region50: #{tpu_custom_call.1} parent=47 // pred_check_branch
              %285 = sbr.rel (0) target = $region52
            $region51: #{tpu_custom_call.1} parent=47 // pred_region
              loop: start=0, step=1, limit=1
              $region53: #{tpu_custom_call.1} parent=51 // loop_pre_header
                _
              $region54: #{tpu_custom_call.1} parent=51 // loop_header
                %s287 = sphi 0, %s291
                %p288 = scmp.ge.s32.totalorder %s287, 1
                %s292 = sphi %s281, %s281
                %s293 = sphi %s275, %s275
              $region55: #{tpu_custom_call.1} parent=51 // loop_header_branch
                %290 = sbr.rel (%p288) target = $region59
              $region56: #{tpu_custom_call.1} parent=51 // loop_body
                %v294 = vld [vmem:[%s292] sm:$0xff]
                %295 = vst [vmem:[%s293] sm:$0xff] %v294
                %v296 = vld [vmem:[%s292 + $0x8] sm:$0xff]
                %297 = vst [vmem:[%s293 + $0x8] sm:$0xff] %v296
                %v298 = vld [vmem:[%s292 + $0x40] sm:$0xff]
                %299 = vst [vmem:[%s293 + $0x10] sm:$0xff] %v298
                %v300 = vld [vmem:[%s292 + $0x48] sm:$0xff]
                %301 = vst [vmem:[%s293 + $0x18] sm:$0xff] %v300
              $region57: #{tpu_custom_call.1} parent=51 // loop_footer
                %s291 = sadd.s32 1, %s287
              $region58: #{tpu_custom_call.1} parent=51 // loop_footer_branch
                %286 = sbr.rel target = $region54
              $region59: #{tpu_custom_call.1} parent=51 // loop_exit
                _
            $region52: #{tpu_custom_call.1} parent=47 // pred_fallthru
              _
            // Predicated region
            $region60: #{tpu_custom_call.1} parent=47 // pred_check
              _
            $region61: #{tpu_custom_call.1} parent=47 // pred_check_branch
              %303 = sbr.rel target = $region63
            $region62: #{tpu_custom_call.1} parent=47 // pred_region
              _
            $region63: #{tpu_custom_call.1} parent=47 // pred_fallthru
              _
          $region48: #{tpu_custom_call.1} parent=43 // pred_fallthru
            _
          %304 = vnop
        $region44: #{tpu_custom_call.1} parent=39 // pred_fallthru
          _
        // Predicated region
        $region64: #{tpu_custom_call.1} parent=39 // pred_check
          %p305 = pneg %p74
        $region65: #{tpu_custom_call.1} parent=39 // pred_check_branch
          %307 = sbr.rel (%p305) target = $region67
        $region66: #{tpu_custom_call.1} parent=39 // pred_region
          %s308 = smul.u32 32, %s21
          %p309 = scmp.lt.s32.totalorder %s308, 127
          %s310 = scalar_select %p309, %s308, 127
          %s311 = smul.addr %s310, 8
          %s312 = scalar_lea.vmem %s1, %s311
          %s313 = smul.u32 32, %s21
        $region67: #{tpu_custom_call.1} parent=39 // pred_fallthru
          _
      $region40: #{tpu_custom_call.1} parent=5 // pred_fallthru
        _
      %p314 = scmp.le.s32.totalorder 1, %s14
      %p315 = scmp.lt.s32.totalorder %s14, 9
      %p316 = pnand %p314, %p315
      %p317 = pneg %p316
      // Predicated region
      $region68: #{tpu_custom_call.1} parent=5 // pred_check
        _
      $region69: #{tpu_custom_call.1} parent=5 // pred_check_branch
        %319 = sbr.rel (%p316) target = $region71
      $region70: #{tpu_custom_call.1} parent=5 // pred_region
        %s320 = ssub.s32 %s14, 1
        %s321 = sand.u32 %s41, 1
        %s322 = sand.u32 %s41, 1
        %s323 = smul.addr %s322, 32
        %s324 = scalar_lea.vmem [#allocation3], %s323
        // Predicated region
        $region72: #{tpu_custom_call.1} parent=70 // pred_check
          %p325 = pneg %p54
        $region73: #{tpu_custom_call.1} parent=70 // pred_check_branch
          %327 = sbr.rel (%p325) target = $region75
        $region74: #{tpu_custom_call.1} parent=70 // pred_region
          _
        $region75: #{tpu_custom_call.1} parent=70 // pred_fallthru
          _
        %s328 = sand.u32 %s41, 1
        %s329 = sand.u32 %s41, 1
        %s330 = smul.addr %s329, 32
        %s331 = scalar_lea.vmem [#allocation3], %s330
        %p332 = pneg %p54
        %p333 = pneg %p51
        %s334 = smul.u32 32, %s23
        %p335 = scmp.lt.s32.totalorder %s334, 127
        %s336 = scalar_select %p335, %s334, 127
        %s337 = smul.addr %s336, 8
        %s338 = scalar_lea.vmem %s1, %s337
        %p339 = pneg %p80
        %p340 = pneg %p77
        %p341 = pneg %p101
        %p342 = pneg %p98
        %p343 = pneg %p122
        %p344 = pneg %p119
        %p345 = pneg %p143
        %p346 = pneg %p140
        %p347 = pneg %p164
        %p348 = pneg %p161
        %p349 = pneg %p185
        %p350 = pneg %p182
        %p351 = pneg %p206
        %p352 = pneg %p203
        %p353 = pneg %p232
        %p354 = pneg %p229
        %s355 = smul.u32 2, %s24
        %p356 = scmp.lt.s32.totalorder %s355, 3
        %s357 = scalar_select %p356, %s355, 3
        %s358 = smul.addr %s357, 8
        %s359 = scalar_lea.vmem %s8, %s358
        %s360 = smul.u32 2, %s24
        %s361 = smul.u32 2, %s23
        %s362 = smul.u32 32, %s23
        %p363 = scmp.lt.s32.totalorder %s362, 127
        %s364 = scalar_select %p363, %s362, 127
        %s365 = smul.addr %s364, 8
        %s366 = scalar_lea.vmem %s1, %s365
        %s367 = smul.u32 32, %s23
        %s368 = smul.u32 2, %s24
        %p369 = scmp.lt.s32.totalorder %s368, 3
        %s370 = scalar_select %p369, %s368, 3
        %s371 = smul.addr %s370, 8
        %s372 = scalar_lea.vmem %s8, %s371
        %s373 = smul.u32 2, %s24
        %p374 = scmp.eq.s32.totalorder %s23, 0
        // Predicated region
        $region76: #{tpu_custom_call.1} parent=70 // pred_check
          %p375 = pneg %p374
        $region77: #{tpu_custom_call.1} parent=70 // pred_check_branch
          %377 = sbr.rel (%p375) target = $region79
        $region78: #{tpu_custom_call.1} parent=70 // pred_region
          %s378 = smul.u32 %s24, 16
          %s379 = scalar_lea.vmem [#allocation2], %s378
          %vm380 = vcmask 818176
          %381 = vst.msk [vmem:[%s379] sm:$0xff] %vm380, 0.0
          %382 = vst.msk [vmem:[%s379 + $0x8] sm:$0xff] %vm380, 0.0
        $region79: #{tpu_custom_call.1} parent=70 // pred_fallthru
          _
        %s383 = smul.u32 %s24, 16
        %s384 = scalar_lea.vmem [#allocation2], %s383
        %v385 = vld [vmem:[%s384] sm:$0xff]
        %v386 = vld [vmem:[%s384 + $0x8] sm:$0xff]
        %v387 = vld [vmem:[%s324] sm:$0xff]
        %v388 = vld [vmem:[%s324 + $0x8] sm:$0xff]
        %v389 = vld [vmem:[%s324 + $0x10] sm:$0xff]
        %v390 = vld [vmem:[%s324 + $0x18] sm:$0xff]
        %v391 = vld [vmem:[%s366] sm:$0xff]
        %v392 = vld [vmem:[%s366 + $0x8] sm:$0xff]
        %v393 = vld [vmem:[%s366 + $0x10] sm:$0xff]
        %v394 = vld [vmem:[%s366 + $0x18] sm:$0xff]
        %v395 = vld [vmem:[%s366 + $0x20] sm:$0xff]
        %v396 = vld [vmem:[%s366 + $0x28] sm:$0xff]
        %v397 = vld [vmem:[%s366 + $0x30] sm:$0xff]
        %v398 = vld [vmem:[%s366 + $0x38] sm:$0xff]
        %v399 = vld [vmem:[%s366 + $0x40] sm:$0xff]
        %v400 = vld [vmem:[%s366 + $0x48] sm:$0xff]
        %v401 = vld [vmem:[%s366 + $0x50] sm:$0xff]
        %v402 = vld [vmem:[%s366 + $0x58] sm:$0xff]
        %v403 = vld [vmem:[%s366 + $0x60] sm:$0xff]
        %v404 = vld [vmem:[%s366 + $0x68] sm:$0xff]
        %v405 = vld [vmem:[%s366 + $0x70] sm:$0xff]
        %v406 = vld [vmem:[%s366 + $0x78] sm:$0xff]
        %v407 = vld [vmem:[%s366 + $0x80] sm:$0xff]
        %v408 = vld [vmem:[%s366 + $0x88] sm:$0xff]
        %v409 = vld [vmem:[%s366 + $0x90] sm:$0xff]
        %v410 = vld [vmem:[%s366 + $0x98] sm:$0xff]
        %v411 = vld [vmem:[%s366 + $0xa0] sm:$0xff]
        %v412 = vld [vmem:[%s366 + $0xa8] sm:$0xff]
        %v413 = vld [vmem:[%s366 + $0xb0] sm:$0xff]
        %v414 = vld [vmem:[%s366 + $0xb8] sm:$0xff]
        %v415 = vld [vmem:[%s366 + $0xc0] sm:$0xff]
        %v416 = vld [vmem:[%s366 + $0xc8] sm:$0xff]
        %v417 = vld [vmem:[%s366 + $0xd0] sm:$0xff]
        %v418 = vld [vmem:[%s366 + $0xd8] sm:$0xff]
        %v419 = vld [vmem:[%s366 + $0xe0] sm:$0xff]
        %v420 = vld [vmem:[%s366 + $0xe8] sm:$0xff]
        %v421 = vld [vmem:[%s366 + $0xf0] sm:$0xff]
        %v422 = vld [vmem:[%s366 + $0xf8] sm:$0xff]
        %423 = vmatprep.subr.mxu0 0.0
        %424 = vmatpush1.msra.mxu0 %v391
        %425 = vmatprep.subr.mxu0 0.0
        %426 = vmatpush1.msra.mxu0 %v392
        %427 = vmatprep.subr.mxu0 0.0
        %428 = vmatpush1.msra.mxu0 %v393
        %429 = vmatprep.subr.mxu0 0.0
        %430 = vmatpush1.msra.mxu0 %v394
        %431 = vmatprep.subr.mxu0 0.0
        %432 = vmatpush1.msra.mxu0 %v395
        %433 = vmatprep.subr.mxu0 0.0
        %434 = vmatpush1.msra.mxu0 %v396
        %435 = vmatprep.subr.mxu0 0.0
        %436 = vmatpush1.msra.mxu0 %v397
        %437 = vmatprep.subr.mxu0 0.0
        %438 = vmatpush1.msra.mxu0 %v398
        %439 = vmatprep.subr.mxu0 0.0
        %440 = vmatpush1.msra.mxu0 %v399
        %441 = vmatprep.subr.mxu0 0.0
        %442 = vmatpush1.msra.mxu0 %v400
        %443 = vmatprep.subr.mxu0 0.0
        %444 = vmatpush1.msra.mxu0 %v401
        %445 = vmatprep.subr.mxu0 0.0
        %446 = vmatpush1.msra.mxu0 %v402
        %447 = vmatprep.subr.mxu0 0.0
        %448 = vmatpush1.msra.mxu0 %v403
        %449 = vmatprep.subr.mxu0 0.0
        %450 = vmatpush1.msra.mxu0 %v404
        %451 = vmatprep.subr.mxu0 0.0
        %452 = vmatpush1.msra.mxu0 %v405
        %453 = vmatprep.subr.mxu0 0.0
        %454 = vmatpush1.msra.mxu0 %v406
        %455 = vmatprep.subr.mxu0 0.0
        %456 = vmatpush1.msra.mxu0 %v407
        %457 = vmatprep.subr.mxu0 0.0
        %458 = vmatpush1.msra.mxu0 %v408
        %459 = vmatprep.subr.mxu0 0.0
        %460 = vmatpush1.msra.mxu0 %v409
        %461 = vmatprep.subr.mxu0 0.0
        %462 = vmatpush1.msra.mxu0 %v410
        %463 = vmatprep.subr.mxu0 0.0
        %464 = vmatpush1.msra.mxu0 %v411
        %465 = vmatprep.subr.mxu0 0.0
        %466 = vmatpush1.msra.mxu0 %v412
        %467 = vmatprep.subr.mxu0 0.0
        %468 = vmatpush1.msra.mxu0 %v413
        %469 = vmatprep.subr.mxu0 0.0
        %470 = vmatpush1.msra.mxu0 %v414
        %471 = vmatprep.subr.mxu0 0.0
        %472 = vmatpush1.msra.mxu0 %v415
        %473 = vmatprep.subr.mxu0 0.0
        %474 = vmatpush1.msra.mxu0 %v416
        %475 = vmatprep.subr.mxu0 0.0
        %476 = vmatpush1.msra.mxu0 %v417
        %477 = vmatprep.subr.mxu0 0.0
        %478 = vmatpush1.msra.mxu0 %v418
        %479 = vmatprep.subr.mxu0 0.0
        %480 = vmatpush1.msra.mxu0 %v419
        %481 = vmatprep.subr.mxu0 0.0
        %482 = vmatpush1.msra.mxu0 %v420
        %483 = vmatprep.subr.mxu0 0.0
        %484 = vmatpush1.msra.mxu0 %v421
        %485 = vmatprep.subr.mxu0 0.0
        %486 = vmatpush1.msra.mxu0 %v422
        %487 = vmatprep.mubr.f32.mxu0 %v388
        %488 = vmatmul.mubr.f32.gmra.mrb[0].mxu0 %v387
        %v489 = vpop.f32.mrb[0].mxu0
        %v490 = vadd.f32 0.0, %v489
        %v491 = vpop.f32.mrb[0].mxu0
        %492 = vmatprep.mubr.f32.mxu0 %v390
        %493 = vmatmul.mubr.f32.gmra.mrb[0].mxu0 %v389
        %v494 = vpop.f32.mrb[0].mxu0
        %v495 = vadd.f32 0.0, %v494
        %v496 = vpop.f32.mrb[0].mxu0
        %497 = vdwg.mxu0
        %v498 = vadd.f32 %v385, %v490
        %v499 = vadd.f32 %v386, %v495
        %vm500 = vcmask 818176
        %501 = vst.msk [vmem:[%s384] sm:$0xff] %vm500, %v498
        %502 = vst.msk [vmem:[%s384 + $0x8] sm:$0xff] %vm500, %v499
        %p503 = scmp.eq.s32.totalorder %s23, 3
        // Predicated region
        $region80: #{tpu_custom_call.1} parent=70 // pred_check
          %p504 = pneg %p503
        $region81: #{tpu_custom_call.1} parent=70 // pred_check_branch
          %506 = sbr.rel (%p504) target = $region83
        $region82: #{tpu_custom_call.1} parent=70 // pred_region
          %v507 = vld [vmem:[%s3] sm:$0xff]
          %v508 = vld [vmem:[%s3 + $0x8] sm:$0xff]
          %v509 = vld [vmem:[%s3 + $0x10] sm:$0xff]
          %v510 = vld [vmem:[%s3 + $0x18] sm:$0xff]
          %v511 = vld [vmem:[%s3 + $0x20] sm:$0xff]
          %v512 = vld [vmem:[%s3 + $0x28] sm:$0xff]
          %v513 = vld [vmem:[%s3 + $0x30] sm:$0xff]
          %v514 = vld [vmem:[%s3 + $0x38] sm:$0xff]
          %v515 = vld [vmem:[%s3 + $0x40] sm:$0xff]
          %v516 = vld [vmem:[%s3 + $0x48] sm:$0xff]
          %v517 = vld [vmem:[%s3 + $0x50] sm:$0xff]
          %v518 = vld [vmem:[%s3 + $0x58] sm:$0xff]
          %v519 = vld [vmem:[%s3 + $0x60] sm:$0x3f]
          %v520 = vld [vmem:[%s4] sm:$0xff]
          %v521 = vld [vmem:[%s4 + $0x8] sm:$0xff]
          %v522 = vld [vmem:[%s4 + $0x10] sm:$0xff]
          %v523 = vld [vmem:[%s4 + $0x18] sm:$0xff]
          %v524 = vld [vmem:[%s4 + $0x20] sm:$0xff]
          %v525 = vld [vmem:[%s4 + $0x28] sm:$0xff]
          %v526 = vld [vmem:[%s4 + $0x30] sm:$0xff]
          %v527 = vld [vmem:[%s4 + $0x38] sm:$0xff]
          %v528 = vld [vmem:[%s4 + $0x40] sm:$0xff]
          %v529 = vld [vmem:[%s4 + $0x48] sm:$0xff]
          %v530 = vld [vmem:[%s4 + $0x50] sm:$0xff]
          %v531 = vld [vmem:[%s4 + $0x58] sm:$0xff]
          %v532 = vld [vmem:[%s4 + $0x60] sm:$0x3f]
          %v533 = vld [vmem:[%s5] sm:$0xff]
          %v534 = vld [vmem:[%s5 + $0x8] sm:$0xff]
          %v535 = vld [vmem:[%s5 + $0x10] sm:$0xff]
          %v536 = vld [vmem:[%s5 + $0x18] sm:$0xff]
          %v537 = vld [vmem:[%s5 + $0x20] sm:$0xff]
          %v538 = vld [vmem:[%s5 + $0x28] sm:$0xff]
          %v539 = vld [vmem:[%s5 + $0x30] sm:$0xff]
          %v540 = vld [vmem:[%s5 + $0x38] sm:$0xff]
          %v541 = vld [vmem:[%s5 + $0x40] sm:$0xff]
          %v542 = vld [vmem:[%s5 + $0x48] sm:$0xff]
          %v543 = vld [vmem:[%s5 + $0x50] sm:$0xff]
          %v544 = vld [vmem:[%s5 + $0x58] sm:$0xff]
          %v545 = vld [vmem:[%s5 + $0x60] sm:$0xff]
          %v546 = vld [vmem:[%s5 + $0x68] sm:$0xff]
          %v547 = vld [vmem:[%s5 + $0x70] sm:$0xff]
          %v548 = vld [vmem:[%s5 + $0x78] sm:$0xff]
          %v549 = vld [vmem:[%s5 + $0x80] sm:$0xff]
          %v550 = vld [vmem:[%s5 + $0x88] sm:$0xff]
          %v551 = vld [vmem:[%s5 + $0x90] sm:$0xff]
          %v552 = vld [vmem:[%s5 + $0x98] sm:$0xff]
          %v553 = vld [vmem:[%s5 + $0xa0] sm:$0xff]
          %v554 = vld [vmem:[%s5 + $0xa8] sm:$0xff]
          %v555 = vld [vmem:[%s5 + $0xb0] sm:$0xff]
          %v556 = vld [vmem:[%s5 + $0xb8] sm:$0xff]
          %v557 = vld [vmem:[%s5 + $0xc0] sm:$0xff]
          %v558 = vld [vmem:[%s5 + $0xc8] sm:$0xff]
          %v559 = vld [vmem:[%s5 + $0xd0] sm:$0xff]
          %v560 = vld [vmem:[%s5 + $0xd8] sm:$0xff]
          %v561 = vld [vmem:[%s5 + $0xe0] sm:$0xff]
          %v562 = vld [vmem:[%s6] sm:$0xff]
          %v563 = vld [vmem:[%s6 + $0x8] sm:$0xff]
          %v564 = vld [vmem:[%s6 + $0x10] sm:$0xff]
          %v565 = vld [vmem:[%s6 + $0x18] sm:$0x7f]
          %v566 = vld [vmem:[%s7] sm:$0xff]
          %v567 = vld [vmem:[%s7 + $0x8] sm:$0x7]
          %v568 = vld [vmem:[%s384] sm:$0xff]
          %v569 = vld [vmem:[%s384 + $0x8] sm:$0xff]
          %v570 = vld [vmem:[%s2] sm:$0x1]
          %v572 = vlaneseq
          %v573 = vshrl.u32 %v572, 7
          %v574 = vsub.s32 0, %v573
          %v575 = vrot.slane %v570, %v574
          %v577 = vadd.f32 %v568, %v575
          %v578 = vadd.f32 %v569, %v575
          %vm579 = vcmp.gt.f32.partialorder %v577, 0.0
          %vm580 = vcmp.gt.f32.partialorder %v578, 0.0
          %v581 = vmin.f32 %v577, 0.0
          %v582 = vmin.f32 %v578, 0.0
          %v583 = vmul.f32 %v581, 1.442695
          %v584 = vpow.pop %v583
          %v585 = vmul.f32 %v582, 1.442695
          %v586 = vpow.pop %v585
          %v587 = vsub.f32 %v584, 1.0
          %v588 = vsub.f32 %v586, 1.0
          %v589 = vsel %vm579, %v577, %v587
          %v590 = vsel %vm580, %v578, %v588
          %v591 = vlaneseq
          %v592 = vshrl.u32 %v591, 7
          %v593 = vsub.s32 4, %v592
          %v594 = vrot.slane %v519, %v593
          %vm595 = vcmask 408576
          %v597 = vsel %vm595, %v589, 0
          %v600 = vsel %vm595, %v590, 0
          %vm602 = vcmask 1041408
          %v604 = vsel %vm602, %v513, 0
          %606 = vmatprep.subr.mxu0 0.0
          %607 = vmatpush1.msra.mxu0 %v507
          %608 = vmatprep.subr.mxu0 0.0
          %609 = vmatpush1.msra.mxu0 %v508
          %610 = vmatprep.subr.mxu0 0.0
          %611 = vmatpush1.msra.mxu0 %v509
          %612 = vmatprep.subr.mxu0 0.0
          %613 = vmatpush1.msra.mxu0 %v510
          %614 = vmatprep.subr.mxu0 0.0
          %615 = vmatpush1.msra.mxu0 %v511
          %616 = vmatprep.subr.mxu0 0.0
          %617 = vmatpush1.msra.mxu0 %v512
          %618 = vmatprep.subr.mxu0 0.0
          %619 = vmatpush1.msra.mxu0 %v604
          %620 = vmatprep.subr.mxu0 0.0
          %621 = vmatpush1.msra.mxu0 0.0
          %622 = vmatprep.subr.mxu0 0.0
          %623 = vmatpush1.msra.mxu0 0.0
          %624 = vmatprep.subr.mxu0 0.0
          %625 = vmatpush1.msra.mxu0 0.0
          %626 = vmatprep.subr.mxu0 0.0
          %627 = vmatpush1.msra.mxu0 0.0
          %628 = vmatprep.subr.mxu0 0.0
          %629 = vmatpush1.msra.mxu0 0.0
          %630 = vmatprep.subr.mxu0 0.0
          %631 = vmatpush1.msra.mxu0 0.0
          %632 = vmatprep.subr.mxu0 0.0
          %633 = vmatpush1.msra.mxu0 0.0
          %634 = vmatprep.subr.mxu0 0.0
          %635 = vmatpush1.msra.mxu0 0.0
          %636 = vmatprep.subr.mxu0 0.0
          %637 = vmatpush1.msra.mxu0 0.0
          %638 = vmatprep.subr.mxu0 0.0
          %639 = vmatpush1.msra.mxu0 0.0
          %640 = vmatprep.subr.mxu0 0.0
          %641 = vmatpush1.msra.mxu0 0.0
          %642 = vmatprep.subr.mxu0 0.0
          %643 = vmatpush1.msra.mxu0 0.0
          %644 = vmatprep.subr.mxu0 0.0
          %645 = vmatpush1.msra.mxu0 0.0
          %646 = vmatprep.subr.mxu0 0.0
          %647 = vmatpush1.msra.mxu0 0.0
          %648 = vmatprep.subr.mxu0 0.0
          %649 = vmatpush1.msra.mxu0 0.0
          %650 = vmatprep.subr.mxu0 0.0
          %651 = vmatpush1.msra.mxu0 0.0
          %652 = vmatprep.subr.mxu0 0.0
          %653 = vmatpush1.msra.mxu0 0.0
          %654 = vmatprep.subr.mxu0 0.0
          %655 = vmatpush1.msra.mxu0 0.0
          %656 = vmatprep.subr.mxu0 0.0
          %657 = vmatpush1.msra.mxu0 0.0
          %658 = vmatprep.subr.mxu0 0.0
          %659 = vmatpush1.msra.mxu0 0.0
          %660 = vmatprep.subr.mxu0 0.0
          %661 = vmatpush1.msra.mxu0 0.0
          %662 = vmatprep.subr.mxu0 0.0
          %663 = vmatpush1.msra.mxu0 0.0
          %664 = vmatprep.subr.mxu0 0.0
          %665 = vmatpush1.msra.mxu0 0.0
          %666 = vmatprep.subr.mxu0 0.0
          %667 = vmatpush1.msra.mxu0 0.0
          %668 = vmatprep.subr.mxu0 0.0
          %669 = vmatpush1.msra.mxu0 0.0
          %670 = vmatprep.mubr.f32.mxu0 0.0
          %671 = vmatmul.mubr.f32.gmra.mrb[0].mxu0 %v597
          %v672 = vpop.f32.mrb[0].mxu0
          %v673 = vadd.f32 %v594, %v672
          %v674 = vpop.f32.mrb[0].mxu0
          %675 = vmatprep.mubr.f32.mxu0 0.0
          %676 = vmatmul.mubr.f32.gmra.mrb[0].mxu0 %v600
          %v677 = vpop.f32.mrb[0].mxu0
          %v678 = vadd.f32 %v594, %v677
          %v679 = vpop.f32.mrb[0].mxu0
          %680 = vdwg.mxu0
          %vm681 = vcmp.gt.f32.partialorder %v673, 0.0
          %vm682 = vcmp.gt.f32.partialorder %v678, 0.0
          %v683 = vmin.f32 %v673, 0.0
          %v684 = vmin.f32 %v678, 0.0
          %v685 = vmul.f32 %v683, 1.442695
          %v686 = vpow.pop %v685
          %v687 = vmul.f32 %v684, 1.442695
          %v688 = vpow.pop %v687
          %v689 = vsub.f32 %v686, 1.0
          %v690 = vsub.f32 %v688, 1.0
          %v691 = vsel %vm681, %v673, %v689
          %v692 = vsel %vm682, %v678, %v690
          %v693 = vlaneseq
          %v694 = vshrl.u32 %v693, 7
          %v695 = vsub.s32 4, %v694
          %v696 = vrot.slane %v532, %v695
          %v698 = vsel %vm595, %v691, 0
          %v701 = vsel %vm595, %v692, 0
          %v704 = vsel %vm602, %v526, 0
          %706 = vmatprep.subr.mxu0 0.0
          %707 = vmatpush1.msra.mxu0 %v520
          %708 = vmatprep.subr.mxu0 0.0
          %709 = vmatpush1.msra.mxu0 %v521
          %710 = vmatprep.subr.mxu0 0.0
          %711 = vmatpush1.msra.mxu0 %v522
          %712 = vmatprep.subr.mxu0 0.0
          %713 = vmatpush1.msra.mxu0 %v523
          %714 = vmatprep.subr.mxu0 0.0
          %715 = vmatpush1.msra.mxu0 %v524
          %716 = vmatprep.subr.mxu0 0.0
          %717 = vmatpush1.msra.mxu0 %v525
          %718 = vmatprep.subr.mxu0 0.0
          %719 = vmatpush1.msra.mxu0 %v704
          %720 = vmatprep.subr.mxu0 0.0
          %721 = vmatpush1.msra.mxu0 0.0
          %722 = vmatprep.subr.mxu0 0.0
          %723 = vmatpush1.msra.mxu0 0.0
          %724 = vmatprep.subr.mxu0 0.0
          %725 = vmatpush1.msra.mxu0 0.0
          %726 = vmatprep.subr.mxu0 0.0
          %727 = vmatpush1.msra.mxu0 0.0
          %728 = vmatprep.subr.mxu0 0.0
          %729 = vmatpush1.msra.mxu0 0.0
          %730 = vmatprep.subr.mxu0 0.0
          %731 = vmatpush1.msra.mxu0 0.0
          %732 = vmatprep.subr.mxu0 0.0
          %733 = vmatpush1.msra.mxu0 0.0
          %734 = vmatprep.subr.mxu0 0.0
          %735 = vmatpush1.msra.mxu0 0.0
          %736 = vmatprep.subr.mxu0 0.0
          %737 = vmatpush1.msra.mxu0 0.0
          %738 = vmatprep.subr.mxu0 0.0
          %739 = vmatpush1.msra.mxu0 0.0
          %740 = vmatprep.subr.mxu0 0.0
          %741 = vmatpush1.msra.mxu0 0.0
          %742 = vmatprep.subr.mxu0 0.0
          %743 = vmatpush1.msra.mxu0 0.0
          %744 = vmatprep.subr.mxu0 0.0
          %745 = vmatpush1.msra.mxu0 0.0
          %746 = vmatprep.subr.mxu0 0.0
          %747 = vmatpush1.msra.mxu0 0.0
          %748 = vmatprep.subr.mxu0 0.0
          %749 = vmatpush1.msra.mxu0 0.0
          %750 = vmatprep.subr.mxu0 0.0
          %751 = vmatpush1.msra.mxu0 0.0
          %752 = vmatprep.subr.mxu0 0.0
          %753 = vmatpush1.msra.mxu0 0.0
          %754 = vmatprep.subr.mxu0 0.0
          %755 = vmatpush1.msra.mxu0 0.0
          %756 = vmatprep.subr.mxu0 0.0
          %757 = vmatpush1.msra.mxu0 0.0
          %758 = vmatprep.subr.mxu0 0.0
          %759 = vmatpush1.msra.mxu0 0.0
          %760 = vmatprep.subr.mxu0 0.0
          %761 = vmatpush1.msra.mxu0 0.0
          %762 = vmatprep.subr.mxu0 0.0
          %763 = vmatpush1.msra.mxu0 0.0
          %764 = vmatprep.subr.mxu0 0.0
          %765 = vmatpush1.msra.mxu0 0.0
          %766 = vmatprep.subr.mxu0 0.0
          %767 = vmatpush1.msra.mxu0 0.0
          %768 = vmatprep.subr.mxu0 0.0
          %769 = vmatpush1.msra.mxu0 0.0
          %770 = vmatprep.mubr.f32.mxu0 0.0
          %771 = vmatmul.mubr.f32.gmra.mrb[0].mxu0 %v698
          %v772 = vpop.f32.mrb[0].mxu0
          %v773 = vadd.f32 %v696, %v772
          %v774 = vpop.f32.mrb[0].mxu0
          %775 = vmatprep.mubr.f32.mxu0 0.0
          %776 = vmatmul.mubr.f32.gmra.mrb[0].mxu0 %v701
          %v777 = vpop.f32.mrb[0].mxu0
          %v778 = vadd.f32 %v696, %v777
          %v779 = vpop.f32.mrb[0].mxu0
          %780 = vdwg.mxu0
          %v781 = vmax.f32 %v577, 0.0
          %v782 = vmax.f32 %v578, 0.0
          %v783 = vlaneseq
          %v784 = vshrl.u32 %v783, 7
          %v785 = vsub.s32 5, %v784
          %v786 = vrot.slane %v519, %v785
          %789 = vrot.lane.b32.xlu0 %v781, 78
          %v790 = vpop.permute.xlu0 %789
          %791 = vrot.lane.b32.xlu0 %v782, 78
          %v792 = vpop.permute.xlu0 %791
          %vm799 = vcmask 1045504
          %v800 = vrot.slane %v513, 2
          %v801 = vrot.slane %v514, 2
          %v802 = vsel %vm799, %v800, %v801
          %v803 = vrot.slane %v515, 2
          %v804 = vsel %vm799, %v801, %v803
          %v805 = vrot.slane %v516, 2
          %v806 = vsel %vm799, %v803, %v805
          %v807 = vrot.slane %v517, 2
          %v808 = vsel %vm799, %v805, %v807
          %v809 = vrot.slane %v518, 2
          %v810 = vsel %vm799, %v807, %v809
          %v811 = vrot.slane %v519, 2
          %v812 = vsel %vm799, %v809, %v811
          %v819 = vsel %vm595, %v790, 0
          %v821 = vsel %vm595, %v792, 0
          %v823 = vsel %vm602, %v811, 0
          %825 = vmatprep.subr.mxu0 0.0
          %826 = vmatpush1.msra.mxu0 %v802
          %827 = vmatprep.subr.mxu0 0.0
          %828 = vmatpush1.msra.mxu0 %v804
          %829 = vmatprep.subr.mxu0 0.0
          %830 = vmatpush1.msra.mxu0 %v806
          %831 = vmatprep.subr.mxu0 0.0
          %832 = vmatpush1.msra.mxu0 %v808
          %833 = vmatprep.subr.mxu0 0.0
          %834 = vmatpush1.msra.mxu0 %v810
          %835 = vmatprep.subr.mxu0 0.0
          %836 = vmatpush1.msra.mxu0 %v812
          %837 = vmatprep.subr.mxu0 0.0
          %838 = vmatpush1.msra.mxu0 %v823
          %839 = vmatprep.subr.mxu0 0.0
          %840 = vmatpush1.msra.mxu0 0.0
          %841 = vmatprep.subr.mxu0 0.0
          %842 = vmatpush1.msra.mxu0 0.0
          %843 = vmatprep.subr.mxu0 0.0
          %844 = vmatpush1.msra.mxu0 0.0
          %845 = vmatprep.subr.mxu0 0.0
          %846 = vmatpush1.msra.mxu0 0.0
          %847 = vmatprep.subr.mxu0 0.0
          %848 = vmatpush1.msra.mxu0 0.0
          %849 = vmatprep.subr.mxu0 0.0
          %850 = vmatpush1.msra.mxu0 0.0
          %851 = vmatprep.subr.mxu0 0.0
          %852 = vmatpush1.msra.mxu0 0.0
          %853 = vmatprep.subr.mxu0 0.0
          %854 = vmatpush1.msra.mxu0 0.0
          %855 = vmatprep.subr.mxu0 0.0
          %856 = vmatpush1.msra.mxu0 0.0
          %857 = vmatprep.subr.mxu0 0.0
          %858 = vmatpush1.msra.mxu0 0.0
          %859 = vmatprep.subr.mxu0 0.0
          %860 = vmatpush1.msra.mxu0 0.0
          %861 = vmatprep.subr.mxu0 0.0
          %862 = vmatpush1.msra.mxu0 0.0
          %863 = vmatprep.subr.mxu0 0.0
          %864 = vmatpush1.msra.mxu0 0.0
          %865 = vmatprep.subr.mxu0 0.0
          %866 = vmatpush1.msra.mxu0 0.0
          %867 = vmatprep.subr.mxu0 0.0
          %868 = vmatpush1.msra.mxu0 0.0
          %869 = vmatprep.subr.mxu0 0.0
          %870 = vmatpush1.msra.mxu0 0.0
          %871 = vmatprep.subr.mxu0 0.0
          %872 = vmatpush1.msra.mxu0 0.0
          %873 = vmatprep.subr.mxu0 0.0
          %874 = vmatpush1.msra.mxu0 0.0
          %875 = vmatprep.subr.mxu0 0.0
          %876 = vmatpush1.msra.mxu0 0.0
          %877 = vmatprep.subr.mxu0 0.0
          %878 = vmatpush1.msra.mxu0 0.0
          %879 = vmatprep.subr.mxu0 0.0
          %880 = vmatpush1.msra.mxu0 0.0
          %881 = vmatprep.subr.mxu0 0.0
          %882 = vmatpush1.msra.mxu0 0.0
          %883 = vmatprep.subr.mxu0 0.0
          %884 = vmatpush1.msra.mxu0 0.0
          %885 = vmatprep.subr.mxu0 0.0
          %886 = vmatpush1.msra.mxu0 0.0
          %887 = vmatprep.subr.mxu0 0.0
          %888 = vmatpush1.msra.mxu0 0.0
          %889 = vmatprep.mubr.f32.mxu0 0.0
          %890 = vmatmul.mubr.f32.gmra.mrb[0].mxu0 %v819
          %v891 = vpop.f32.mrb[0].mxu0
          %v892 = vadd.f32 %v786, %v891
          %v893 = vpop.f32.mrb[0].mxu0
          %894 = vmatprep.mubr.f32.mxu0 0.0
          %895 = vmatmul.mubr.f32.gmra.mrb[0].mxu0 %v821
          %v896 = vpop.f32.mrb[0].mxu0
          %v897 = vadd.f32 %v786, %v896
          %v898 = vpop.f32.mrb[0].mxu0
          %899 = vdwg.mxu0
          %v900 = vmax.f32 %v892, 0.0
          %v901 = vmax.f32 %v897, 0.0
          %v902 = vlaneseq
          %v903 = vshrl.u32 %v902, 7
          %v904 = vsub.s32 5, %v903
          %v905 = vrot.slane %v532, %v904
          %v912 = vrot.slane %v526, 2
          %v913 = vrot.slane %v527, 2
          %v914 = vsel %vm799, %v912, %v913
          %v915 = vrot.slane %v528, 2
          %v916 = vsel %vm799, %v913, %v915
          %v917 = vrot.slane %v529, 2
          %v918 = vsel %vm799, %v915, %v917
          %v919 = vrot.slane %v530, 2
          %v920 = vsel %vm799, %v917, %v919
          %v921 = vrot.slane %v531, 2
          %v922 = vsel %vm799, %v919, %v921
          %v923 = vrot.slane %v532, 2
          %v924 = vsel %vm799, %v921, %v923
          %v932 = vsel %vm595, %v900, 0
          %v935 = vsel %vm595, %v901, 0
          %v937 = vsel %vm602, %v923, 0
          %939 = vmatprep.subr.mxu0 0.0
          %940 = vmatpush1.msra.mxu0 %v914
          %941 = vmatprep.subr.mxu0 0.0
          %942 = vmatpush1.msra.mxu0 %v916
          %943 = vmatprep.subr.mxu0 0.0
          %944 = vmatpush1.msra.mxu0 %v918
          %945 = vmatprep.subr.mxu0 0.0
          %946 = vmatpush1.msra.mxu0 %v920
          %947 = vmatprep.subr.mxu0 0.0
          %948 = vmatpush1.msra.mxu0 %v922
          %949 = vmatprep.subr.mxu0 0.0
          %950 = vmatpush1.msra.mxu0 %v924
          %951 = vmatprep.subr.mxu0 0.0
          %952 = vmatpush1.msra.mxu0 %v937
          %953 = vmatprep.subr.mxu0 0.0
          %954 = vmatpush1.msra.mxu0 0.0
          %955 = vmatprep.subr.mxu0 0.0
          %956 = vmatpush1.msra.mxu0 0.0
          %957 = vmatprep.subr.mxu0 0.0
          %958 = vmatpush1.msra.mxu0 0.0
          %959 = vmatprep.subr.mxu0 0.0
          %960 = vmatpush1.msra.mxu0 0.0
          %961 = vmatprep.subr.mxu0 0.0
          %962 = vmatpush1.msra.mxu0 0.0
          %963 = vmatprep.subr.mxu0 0.0
          %964 = vmatpush1.msra.mxu0 0.0
          %965 = vmatprep.subr.mxu0 0.0
          %966 = vmatpush1.msra.mxu0 0.0
          %967 = vmatprep.subr.mxu0 0.0
          %968 = vmatpush1.msra.mxu0 0.0
          %969 = vmatprep.subr.mxu0 0.0
          %970 = vmatpush1.msra.mxu0 0.0
          %971 = vmatprep.subr.mxu0 0.0
          %972 = vmatpush1.msra.mxu0 0.0
          %973 = vmatprep.subr.mxu0 0.0
          %974 = vmatpush1.msra.mxu0 0.0
          %975 = vmatprep.subr.mxu0 0.0
          %976 = vmatpush1.msra.mxu0 0.0
          %977 = vmatprep.subr.mxu0 0.0
          %978 = vmatpush1.msra.mxu0 0.0
          %979 = vmatprep.subr.mxu0 0.0
          %980 = vmatpush1.msra.mxu0 0.0
          %981 = vmatprep.subr.mxu0 0.0
          %982 = vmatpush1.msra.mxu0 0.0
          %983 = vmatprep.subr.mxu0 0.0
          %984 = vmatpush1.msra.mxu0 0.0
          %985 = vmatprep.subr.mxu0 0.0
          %986 = vmatpush1.msra.mxu0 0.0
          %987 = vmatprep.subr.mxu0 0.0
          %988 = vmatpush1.msra.mxu0 0.0
          %989 = vmatprep.subr.mxu0 0.0
          %990 = vmatpush1.msra.mxu0 0.0
          %991 = vmatprep.subr.mxu0 0.0
          %992 = vmatpush1.msra.mxu0 0.0
          %993 = vmatprep.subr.mxu0 0.0
          %994 = vmatpush1.msra.mxu0 0.0
          %995 = vmatprep.subr.mxu0 0.0
          %996 = vmatpush1.msra.mxu0 0.0
          %997 = vmatprep.subr.mxu0 0.0
          %998 = vmatpush1.msra.mxu0 0.0
          %999 = vmatprep.subr.mxu0 0.0
          %1000 = vmatpush1.msra.mxu0 0.0
          %1001 = vmatprep.subr.mxu0 0.0
          %1002 = vmatpush1.msra.mxu0 0.0
          %1003 = vmatprep.mubr.f32.mxu0 0.0
          %1004 = vmatmul.mubr.f32.gmra.mrb[0].mxu0 %v932
          %v1005 = vpop.f32.mrb[0].mxu0
          %v1006 = vadd.f32 %v905, %v1005
          %v1007 = vpop.f32.mrb[0].mxu0
          %1008 = vmatprep.mubr.f32.mxu0 0.0
          %1009 = vmatmul.mubr.f32.gmra.mrb[0].mxu0 %v935
          %v1010 = vpop.f32.mrb[0].mxu0
          %v1011 = vadd.f32 %v905, %v1010
          %v1012 = vpop.f32.mrb[0].mxu0
          %1013 = vdwg.mxu0
          %v1014 = vmax.f32 %v1006, 0.0
          %v1015 = vmax.f32 %v1011, 0.0
          %v1016 = vadd.f32 %v1014, 0.001
          %v1017 = vadd.f32 %v1015, 0.001
          %v1018 = vlog2.pop %v1016
          %v1019 = vmul.f32 %v1018, 0.6931472
          %v1020 = vlog2.pop %v1017
          %v1021 = vmul.f32 %v1020, 0.6931472
          %v1029 = vrot.slane %v539, 2
          %v1030 = vrot.slane %v540, 2
          %v1031 = vsel %vm799, %v1029, %v1030
          %v1032 = vrot.slane %v541, 2
          %v1033 = vsel %vm799, %v1030, %v1032
          %v1034 = vrot.slane %v542, 2
          %v1035 = vsel %vm799, %v1032, %v1034
          %v1036 = vrot.slane %v543, 2
          %v1037 = vsel %vm799, %v1034, %v1036
          %v1038 = vrot.slane %v544, 2
          %v1039 = vsel %vm799, %v1036, %v1038
          %v1040 = vrot.slane %v545, 2
          %v1041 = vsel %vm799, %v1038, %v1040
          %v1049 = vsel %vm595, %v1019, 0
          %v1052 = vsel %vm595, %v1021, 0
          %v1054 = vsel %vm602, %v1040, 0
          %1056 = vmatprep.subr.mxu0 0.0
          %1057 = vmatpush1.msra.mxu0 %v1031
          %1058 = vmatprep.subr.mxu0 0.0
          %1059 = vmatpush1.msra.mxu0 %v1033
          %1060 = vmatprep.subr.mxu0 0.0
          %1061 = vmatpush1.msra.mxu0 %v1035
          %1062 = vmatprep.subr.mxu0 0.0
          %1063 = vmatpush1.msra.mxu0 %v1037
          %1064 = vmatprep.subr.mxu0 0.0
          %1065 = vmatpush1.msra.mxu0 %v1039
          %1066 = vmatprep.subr.mxu0 0.0
          %1067 = vmatpush1.msra.mxu0 %v1041
          %1068 = vmatprep.subr.mxu0 0.0
          %1069 = vmatpush1.msra.mxu0 %v1054
          %1070 = vmatprep.subr.mxu0 0.0
          %1071 = vmatpush1.msra.mxu0 0.0
          %1072 = vmatprep.subr.mxu0 0.0
          %1073 = vmatpush1.msra.mxu0 0.0
          %1074 = vmatprep.subr.mxu0 0.0
          %1075 = vmatpush1.msra.mxu0 0.0
          %1076 = vmatprep.subr.mxu0 0.0
          %1077 = vmatpush1.msra.mxu0 0.0
          %1078 = vmatprep.subr.mxu0 0.0
          %1079 = vmatpush1.msra.mxu0 0.0
          %1080 = vmatprep.subr.mxu0 0.0
          %1081 = vmatpush1.msra.mxu0 0.0
          %1082 = vmatprep.subr.mxu0 0.0
          %1083 = vmatpush1.msra.mxu0 0.0
          %1084 = vmatprep.subr.mxu0 0.0
          %1085 = vmatpush1.msra.mxu0 0.0
          %1086 = vmatprep.subr.mxu0 0.0
          %1087 = vmatpush1.msra.mxu0 0.0
          %1088 = vmatprep.subr.mxu0 0.0
          %1089 = vmatpush1.msra.mxu0 0.0
          %1090 = vmatprep.subr.mxu0 0.0
          %1091 = vmatpush1.msra.mxu0 0.0
          %1092 = vmatprep.subr.mxu0 0.0
          %1093 = vmatpush1.msra.mxu0 0.0
          %1094 = vmatprep.subr.mxu0 0.0
          %1095 = vmatpush1.msra.mxu0 0.0
          %1096 = vmatprep.subr.mxu0 0.0
          %1097 = vmatpush1.msra.mxu0 0.0
          %1098 = vmatprep.subr.mxu0 0.0
          %1099 = vmatpush1.msra.mxu0 0.0
          %1100 = vmatprep.subr.mxu0 0.0
          %1101 = vmatpush1.msra.mxu0 0.0
          %1102 = vmatprep.subr.mxu0 0.0
          %1103 = vmatpush1.msra.mxu0 0.0
          %1104 = vmatprep.subr.mxu0 0.0
          %1105 = vmatpush1.msra.mxu0 0.0
          %1106 = vmatprep.subr.mxu0 0.0
          %1107 = vmatpush1.msra.mxu0 0.0
          %1108 = vmatprep.subr.mxu0 0.0
          %1109 = vmatpush1.msra.mxu0 0.0
          %1110 = vmatprep.subr.mxu0 0.0
          %1111 = vmatpush1.msra.mxu0 0.0
          %1112 = vmatprep.subr.mxu0 0.0
          %1113 = vmatpush1.msra.mxu0 0.0
          %1114 = vmatprep.subr.mxu0 0.0
          %1115 = vmatpush1.msra.mxu0 0.0
          %1116 = vmatprep.subr.mxu0 0.0
          %1117 = vmatpush1.msra.mxu0 0.0
          %1118 = vmatprep.subr.mxu0 0.0
          %1119 = vmatpush1.msra.mxu0 0.0
          %1120 = vmatprep.mubr.f32.mxu0 0.0
          %1121 = vmatmul.mubr.f32.gmra.mrb[0].mxu0 %v1049
          %v1122 = vpop.f32.mrb[0].mxu0
          %v1123 = vadd.f32 0.0, %v1122
          %v1124 = vpop.f32.mrb[0].mxu0
          %1125 = vmatprep.mubr.f32.mxu0 0.0
          %1126 = vmatmul.mubr.f32.gmra.mrb[0].mxu0 %v1052
          %v1127 = vpop.f32.mrb[0].mxu0
          %v1128 = vadd.f32 0.0, %v1127
          %v1129 = vpop.f32.mrb[0].mxu0
          %1130 = vdwg.mxu0
          %v1132 = vsel %vm595, %v773, 0
          %v1135 = vsel %vm595, %v778, 0
          %v1137 = vsel %vm602, %v539, 0
          %1139 = vmatprep.subr.mxu0 0.0
          %1140 = vmatpush1.msra.mxu0 %v533
          %1141 = vmatprep.subr.mxu0 0.0
          %1142 = vmatpush1.msra.mxu0 %v534
          %1143 = vmatprep.subr.mxu0 0.0
          %1144 = vmatpush1.msra.mxu0 %v535
          %1145 = vmatprep.subr.mxu0 0.0
          %1146 = vmatpush1.msra.mxu0 %v536
          %1147 = vmatprep.subr.mxu0 0.0
          %1148 = vmatpush1.msra.mxu0 %v537
          %1149 = vmatprep.subr.mxu0 0.0
          %1150 = vmatpush1.msra.mxu0 %v538
          %1151 = vmatprep.subr.mxu0 0.0
          %1152 = vmatpush1.msra.mxu0 %v1137
          %1153 = vmatprep.subr.mxu0 0.0
          %1154 = vmatpush1.msra.mxu0 0.0
          %1155 = vmatprep.subr.mxu0 0.0
          %1156 = vmatpush1.msra.mxu0 0.0
          %1157 = vmatprep.subr.mxu0 0.0
          %1158 = vmatpush1.msra.mxu0 0.0
          %1159 = vmatprep.subr.mxu0 0.0
          %1160 = vmatpush1.msra.mxu0 0.0
          %1161 = vmatprep.subr.mxu0 0.0
          %1162 = vmatpush1.msra.mxu0 0.0
          %1163 = vmatprep.subr.mxu0 0.0
          %1164 = vmatpush1.msra.mxu0 0.0
          %1165 = vmatprep.subr.mxu0 0.0
          %1166 = vmatpush1.msra.mxu0 0.0
          %1167 = vmatprep.subr.mxu0 0.0
          %1168 = vmatpush1.msra.mxu0 0.0
          %1169 = vmatprep.subr.mxu0 0.0
          %1170 = vmatpush1.msra.mxu0 0.0
          %1171 = vmatprep.subr.mxu0 0.0
          %1172 = vmatpush1.msra.mxu0 0.0
          %1173 = vmatprep.subr.mxu0 0.0
          %1174 = vmatpush1.msra.mxu0 0.0
          %1175 = vmatprep.subr.mxu0 0.0
          %1176 = vmatpush1.msra.mxu0 0.0
          %1177 = vmatprep.subr.mxu0 0.0
          %1178 = vmatpush1.msra.mxu0 0.0
          %1179 = vmatprep.subr.mxu0 0.0
          %1180 = vmatpush1.msra.mxu0 0.0
          %1181 = vmatprep.subr.mxu0 0.0
          %1182 = vmatpush1.msra.mxu0 0.0
          %1183 = vmatprep.subr.mxu0 0.0
          %1184 = vmatpush1.msra.mxu0 0.0
          %1185 = vmatprep.subr.mxu0 0.0
          %1186 = vmatpush1.msra.mxu0 0.0
          %1187 = vmatprep.subr.mxu0 0.0
          %1188 = vmatpush1.msra.mxu0 0.0
          %1189 = vmatprep.subr.mxu0 0.0
          %1190 = vmatpush1.msra.mxu0 0.0
          %1191 = vmatprep.subr.mxu0 0.0
          %1192 = vmatpush1.msra.mxu0 0.0
          %1193 = vmatprep.subr.mxu0 0.0
          %1194 = vmatpush1.msra.mxu0 0.0
          %1195 = vmatprep.subr.mxu0 0.0
          %1196 = vmatpush1.msra.mxu0 0.0
          %1197 = vmatprep.subr.mxu0 0.0
          %1198 = vmatpush1.msra.mxu0 0.0
          %1199 = vmatprep.subr.mxu0 0.0
          %1200 = vmatpush1.msra.mxu0 0.0
          %1201 = vmatprep.subr.mxu0 0.0
          %1202 = vmatpush1.msra.mxu0 0.0
          %1203 = vmatprep.mubr.f32.mxu0 0.0
          %1204 = vmatmul.mubr.f32.gmra.mrb[0].mxu0 %v1132
          %v1205 = vpop.f32.mrb[0].mxu0
          %v1206 = vadd.f32 %v1123, %v1205
          %v1207 = vpop.f32.mrb[0].mxu0
          %1208 = vmatprep.mubr.f32.mxu0 0.0
          %1209 = vmatmul.mubr.f32.gmra.mrb[0].mxu0 %v1135
          %v1210 = vpop.f32.mrb[0].mxu0
          %v1211 = vadd.f32 %v1128, %v1210
          %v1212 = vpop.f32.mrb[0].mxu0
          %1213 = vdwg.mxu0
          %v1214 = vlaneseq
          %v1215 = vshrl.u32 %v1214, 7
          %v1216 = vsub.s32 4, %v1215
          %v1217 = vrot.slane %v545, %v1216
          %v1218 = vadd.f32 %v1206, %v1217
          %v1219 = vadd.f32 %v1211, %v1217
          %v1220 = vmax.f32 %v773, 0.0
          %v1221 = vmax.f32 %v778, 0.0
          %v1222 = vadd.f32 %v1220, 0.001
          %v1223 = vadd.f32 %v1221, 0.001
          %v1224 = vmax.f32 %v1019, 0.0
          %v1225 = vmax.f32 %v1021, 0.0
          %v1226 = vadd.f32 %v1224, 0.001
          %v1227 = vadd.f32 %v1225, 0.001
          %vm1228 = vcmp.gt.f32.partialorder %v1218, 0.0
          %vm1229 = vcmp.gt.f32.partialorder %v1219, 0.0
          %v1230 = vmin.f32 %v1218, 0.0
          %v1231 = vmin.f32 %v1219, 0.0
          %v1232 = vmul.f32 %v1230, 1.442695
          %v1233 = vpow.pop %v1232
          %v1234 = vmul.f32 %v1231, 1.442695
          %v1235 = vpow.pop %v1234
          %v1236 = vsub.f32 %v1233, 1.0
          %v1237 = vsub.f32 %v1235, 1.0
          %v1238 = vsel %vm1228, %v1218, %v1236
          %v1239 = vsel %vm1229, %v1219, %v1237
          %vm1240 = vcmp.gt.f32.partialorder %v1222, 0.0
          %vm1241 = vcmp.gt.f32.partialorder %v1223, 0.0
          %v1242 = vmin.f32 %v1222, 0.0
          %v1243 = vmin.f32 %v1223, 0.0
          %v1244 = vmul.f32 %v1242, 1.442695
          %v1245 = vpow.pop %v1244
          %v1246 = vmul.f32 %v1243, 1.442695
          %v1247 = vpow.pop %v1246
          %v1248 = vsub.f32 %v1245, 1.0
          %v1249 = vsub.f32 %v1247, 1.0
          %v1250 = vsel %vm1240, %v1222, %v1248
          %v1251 = vsel %vm1241, %v1223, %v1249
          %vm1252 = vcmp.gt.f32.partialorder %v1226, 0.0
          %vm1253 = vcmp.gt.f32.partialorder %v1227, 0.0
          %v1254 = vmin.f32 %v1226, 0.0
          %v1255 = vmin.f32 %v1227, 0.0
          %v1256 = vmul.f32 %v1254, 1.442695
          %v1257 = vpow.pop %v1256
          %v1258 = vmul.f32 %v1255, 1.442695
          %v1259 = vpow.pop %v1258
          %v1260 = vsub.f32 %v1257, 1.0
          %v1261 = vsub.f32 %v1259, 1.0
          %v1262 = vsel %vm1252, %v1226, %v1260
          %v1263 = vsel %vm1253, %v1227, %v1261
          %vm1271 = vcmask 1044480
          %v1272 = vrot.slane %v549, 3
          %v1273 = vrot.slane %v550, 3
          %v1274 = vsel %vm1271, %v1272, %v1273
          %v1275 = vrot.slane %v551, 3
          %v1276 = vsel %vm1271, %v1273, %v1275
          %v1277 = vrot.slane %v552, 3
          %v1278 = vsel %vm1271, %v1275, %v1277
          %v1279 = vrot.slane %v553, 3
          %v1280 = vsel %vm1271, %v1277, %v1279
          %v1281 = vrot.slane %v554, 3
          %v1282 = vsel %vm1271, %v1279, %v1281
          %v1283 = vrot.slane %v555, 3
          %v1284 = vsel %vm1271, %v1281, %v1283
          %v1292 = vsel %vm595, %v1250, 0
          %v1295 = vsel %vm595, %v1251, 0
          %v1297 = vsel %vm602, %v1283, 0
          %1299 = vmatprep.subr.mxu0 0.0
          %1300 = vmatpush1.msra.mxu0 %v1274
          %1301 = vmatprep.subr.mxu0 0.0
          %1302 = vmatpush1.msra.mxu0 %v1276
          %1303 = vmatprep.subr.mxu0 0.0
          %1304 = vmatpush1.msra.mxu0 %v1278
          %1305 = vmatprep.subr.mxu0 0.0
          %1306 = vmatpush1.msra.mxu0 %v1280
          %1307 = vmatprep.subr.mxu0 0.0
          %1308 = vmatpush1.msra.mxu0 %v1282
          %1309 = vmatprep.subr.mxu0 0.0
          %1310 = vmatpush1.msra.mxu0 %v1284
          %1311 = vmatprep.subr.mxu0 0.0
          %1312 = vmatpush1.msra.mxu0 %v1297
          %1313 = vmatprep.subr.mxu0 0.0
          %1314 = vmatpush1.msra.mxu0 0.0
          %1315 = vmatprep.subr.mxu0 0.0
          %1316 = vmatpush1.msra.mxu0 0.0
          %1317 = vmatprep.subr.mxu0 0.0
          %1318 = vmatpush1.msra.mxu0 0.0
          %1319 = vmatprep.subr.mxu0 0.0
          %1320 = vmatpush1.msra.mxu0 0.0
          %1321 = vmatprep.subr.mxu0 0.0
          %1322 = vmatpush1.msra.mxu0 0.0
          %1323 = vmatprep.subr.mxu0 0.0
          %1324 = vmatpush1.msra.mxu0 0.0
          %1325 = vmatprep.subr.mxu0 0.0
          %1326 = vmatpush1.msra.mxu0 0.0
          %1327 = vmatprep.subr.mxu0 0.0
          %1328 = vmatpush1.msra.mxu0 0.0
          %1329 = vmatprep.subr.mxu0 0.0
          %1330 = vmatpush1.msra.mxu0 0.0
          %1331 = vmatprep.subr.mxu0 0.0
          %1332 = vmatpush1.msra.mxu0 0.0
          %1333 = vmatprep.subr.mxu0 0.0
          %1334 = vmatpush1.msra.mxu0 0.0
          %1335 = vmatprep.subr.mxu0 0.0
          %1336 = vmatpush1.msra.mxu0 0.0
          %1337 = vmatprep.subr.mxu0 0.0
          %1338 = vmatpush1.msra.mxu0 0.0
          %1339 = vmatprep.subr.mxu0 0.0
          %1340 = vmatpush1.msra.mxu0 0.0
          %1341 = vmatprep.subr.mxu0 0.0
          %1342 = vmatpush1.msra.mxu0 0.0
          %1343 = vmatprep.subr.mxu0 0.0
          %1344 = vmatpush1.msra.mxu0 0.0
          %1345 = vmatprep.subr.mxu0 0.0
          %1346 = vmatpush1.msra.mxu0 0.0
          %1347 = vmatprep.subr.mxu0 0.0
          %1348 = vmatpush1.msra.mxu0 0.0
          %1349 = vmatprep.subr.mxu0 0.0
          %1350 = vmatpush1.msra.mxu0 0.0
          %1351 = vmatprep.subr.mxu0 0.0
          %1352 = vmatpush1.msra.mxu0 0.0
          %1353 = vmatprep.subr.mxu0 0.0
          %1354 = vmatpush1.msra.mxu0 0.0
          %1355 = vmatprep.subr.mxu0 0.0
          %1356 = vmatpush1.msra.mxu0 0.0
          %1357 = vmatprep.subr.mxu0 0.0
          %1358 = vmatpush1.msra.mxu0 0.0
          %1359 = vmatprep.subr.mxu0 0.0
          %1360 = vmatpush1.msra.mxu0 0.0
          %1361 = vmatprep.subr.mxu0 0.0
          %1362 = vmatpush1.msra.mxu0 0.0
          %1363 = vmatprep.mubr.f32.mxu0 0.0
          %1364 = vmatmul.mubr.f32.gmra.mrb[0].mxu0 %v1292
          %v1365 = vpop.f32.mrb[0].mxu0
          %v1366 = vadd.f32 0.0, %v1365
          %v1367 = vpop.f32.mrb[0].mxu0
          %1368 = vmatprep.mubr.f32.mxu0 0.0
          %1369 = vmatmul.mubr.f32.gmra.mrb[0].mxu0 %v1295
          %v1370 = vpop.f32.mrb[0].mxu0
          %v1371 = vadd.f32 0.0, %v1370
          %v1372 = vpop.f32.mrb[0].mxu0
          %1373 = vdwg.mxu0
          %vm1377 = vcmask 1042432
          %v1378 = vrot.slane %v545, 5
          %v1379 = vrot.slane %v546, 5
          %v1380 = vsel %vm1377, %v1378, %v1379
          %v1381 = vrot.slane %v547, 5
          %v1382 = vsel %vm1377, %v1379, %v1381
          %v1383 = vrot.slane %v548, 5
          %v1384 = vsel %vm1377, %v1381, %v1383
          %v1385 = vrot.slane %v549, 5
          %v1386 = vsel %vm1377, %v1383, %v1385
          %vm1390 = vcmask 244736
          %v1392 = vsel %vm1390, %v1238, 0
          %v1395 = vsel %vm1390, %v1239, 0
          %v1397 = vsel %vm799, %v1386, 0
          %1399 = vmatprep.subr.mxu0 0.0
          %1400 = vmatpush1.msra.mxu0 %v1380
          %1401 = vmatprep.subr.mxu0 0.0
          %1402 = vmatpush1.msra.mxu0 %v1382
          %1403 = vmatprep.subr.mxu0 0.0
          %1404 = vmatpush1.msra.mxu0 %v1384
          %1405 = vmatprep.subr.mxu0 0.0
          %1406 = vmatpush1.msra.mxu0 %v1397
          %1407 = vmatprep.subr.mxu0 0.0
          %1408 = vmatpush1.msra.mxu0 0.0
          %1409 = vmatprep.subr.mxu0 0.0
          %1410 = vmatpush1.msra.mxu0 0.0
          %1411 = vmatprep.subr.mxu0 0.0
          %1412 = vmatpush1.msra.mxu0 0.0
          %1413 = vmatprep.subr.mxu0 0.0
          %1414 = vmatpush1.msra.mxu0 0.0
          %1415 = vmatprep.subr.mxu0 0.0
          %1416 = vmatpush1.msra.mxu0 0.0
          %1417 = vmatprep.subr.mxu0 0.0
          %1418 = vmatpush1.msra.mxu0 0.0
          %1419 = vmatprep.subr.mxu0 0.0
          %1420 = vmatpush1.msra.mxu0 0.0
          %1421 = vmatprep.subr.mxu0 0.0
          %1422 = vmatpush1.msra.mxu0 0.0
          %1423 = vmatprep.subr.mxu0 0.0
          %1424 = vmatpush1.msra.mxu0 0.0
          %1425 = vmatprep.subr.mxu0 0.0
          %1426 = vmatpush1.msra.mxu0 0.0
          %1427 = vmatprep.subr.mxu0 0.0
          %1428 = vmatpush1.msra.mxu0 0.0
          %1429 = vmatprep.subr.mxu0 0.0
          %1430 = vmatpush1.msra.mxu0 0.0
          %1431 = vmatprep.subr.mxu0 0.0
          %1432 = vmatpush1.msra.mxu0 0.0
          %1433 = vmatprep.subr.mxu0 0.0
          %1434 = vmatpush1.msra.mxu0 0.0
          %1435 = vmatprep.subr.mxu0 0.0
          %1436 = vmatpush1.msra.mxu0 0.0
          %1437 = vmatprep.subr.mxu0 0.0
          %1438 = vmatpush1.msra.mxu0 0.0
          %1439 = vmatprep.subr.mxu0 0.0
          %1440 = vmatpush1.msra.mxu0 0.0
          %1441 = vmatprep.subr.mxu0 0.0
          %1442 = vmatpush1.msra.mxu0 0.0
          %1443 = vmatprep.subr.mxu0 0.0
          %1444 = vmatpush1.msra.mxu0 0.0
          %1445 = vmatprep.subr.mxu0 0.0
          %1446 = vmatpush1.msra.mxu0 0.0
          %1447 = vmatprep.subr.mxu0 0.0
          %1448 = vmatpush1.msra.mxu0 0.0
          %1449 = vmatprep.subr.mxu0 0.0
          %1450 = vmatpush1.msra.mxu0 0.0
          %1451 = vmatprep.subr.mxu0 0.0
          %1452 = vmatpush1.msra.mxu0 0.0
          %1453 = vmatprep.subr.mxu0 0.0
          %1454 = vmatpush1.msra.mxu0 0.0
          %1455 = vmatprep.subr.mxu0 0.0
          %1456 = vmatpush1.msra.mxu0 0.0
          %1457 = vmatprep.subr.mxu0 0.0
          %1458 = vmatpush1.msra.mxu0 0.0
          %1459 = vmatprep.subr.mxu0 0.0
          %1460 = vmatpush1.msra.mxu0 0.0
          %1461 = vmatprep.subr.mxu0 0.0
          %1462 = vmatpush1.msra.mxu0 0.0
          %1463 = vmatprep.mubr.f32.mxu0 0.0
          %1464 = vmatmul.mubr.f32.gmra.mrb[0].mxu0 %v1392
          %v1465 = vpop.f32.mrb[0].mxu0
          %v1466 = vadd.f32 %v1366, %v1465
          %v1467 = vpop.f32.mrb[0].mxu0
          %1468 = vmatprep.mubr.f32.mxu0 0.0
          %1469 = vmatmul.mubr.f32.gmra.mrb[0].mxu0 %v1395
          %v1470 = vpop.f32.mrb[0].mxu0
          %v1471 = vadd.f32 %v1371, %v1470
          %v1472 = vpop.f32.mrb[0].mxu0
          %1473 = vdwg.mxu0
          %v1480 = vrot.slane %v555, 5
          %v1481 = vrot.slane %v556, 5
          %v1482 = vsel %vm1377, %v1480, %v1481
          %v1483 = vrot.slane %v557, 5
          %v1484 = vsel %vm1377, %v1481, %v1483
          %v1485 = vrot.slane %v558, 5
          %v1486 = vsel %vm1377, %v1483, %v1485
          %v1487 = vrot.slane %v559, 5
          %v1488 = vsel %vm1377, %v1485, %v1487
          %v1489 = vrot.slane %v560, 5
          %v1490 = vsel %vm1377, %v1487, %v1489
          %v1491 = vrot.slane %v561, 5
          %v1492 = vsel %vm1377, %v1489, %v1491
          %v1500 = vsel %vm595, %v1262, 0
          %v1503 = vsel %vm595, %v1263, 0
          %v1505 = vsel %vm602, %v1491, 0
          %1507 = vmatprep.subr.mxu0 0.0
          %1508 = vmatpush1.msra.mxu0 %v1482
          %1509 = vmatprep.subr.mxu0 0.0
          %1510 = vmatpush1.msra.mxu0 %v1484
          %1511 = vmatprep.subr.mxu0 0.0
          %1512 = vmatpush1.msra.mxu0 %v1486
          %1513 = vmatprep.subr.mxu0 0.0
          %1514 = vmatpush1.msra.mxu0 %v1488
          %1515 = vmatprep.subr.mxu0 0.0
          %1516 = vmatpush1.msra.mxu0 %v1490
          %1517 = vmatprep.subr.mxu0 0.0
          %1518 = vmatpush1.msra.mxu0 %v1492
          %1519 = vmatprep.subr.mxu0 0.0
          %1520 = vmatpush1.msra.mxu0 %v1505
          %1521 = vmatprep.subr.mxu0 0.0
          %1522 = vmatpush1.msra.mxu0 0.0
          %1523 = vmatprep.subr.mxu0 0.0
          %1524 = vmatpush1.msra.mxu0 0.0
          %1525 = vmatprep.subr.mxu0 0.0
          %1526 = vmatpush1.msra.mxu0 0.0
          %1527 = vmatprep.subr.mxu0 0.0
          %1528 = vmatpush1.msra.mxu0 0.0
          %1529 = vmatprep.subr.mxu0 0.0
          %1530 = vmatpush1.msra.mxu0 0.0
          %1531 = vmatprep.subr.mxu0 0.0
          %1532 = vmatpush1.msra.mxu0 0.0
          %1533 = vmatprep.subr.mxu0 0.0
          %1534 = vmatpush1.msra.mxu0 0.0
          %1535 = vmatprep.subr.mxu0 0.0
          %1536 = vmatpush1.msra.mxu0 0.0
          %1537 = vmatprep.subr.mxu0 0.0
          %1538 = vmatpush1.msra.mxu0 0.0
          %1539 = vmatprep.subr.mxu0 0.0
          %1540 = vmatpush1.msra.mxu0 0.0
          %1541 = vmatprep.subr.mxu0 0.0
          %1542 = vmatpush1.msra.mxu0 0.0
          %1543 = vmatprep.subr.mxu0 0.0
          %1544 = vmatpush1.msra.mxu0 0.0
          %1545 = vmatprep.subr.mxu0 0.0
          %1546 = vmatpush1.msra.mxu0 0.0
          %1547 = vmatprep.subr.mxu0 0.0
          %1548 = vmatpush1.msra.mxu0 0.0
          %1549 = vmatprep.subr.mxu0 0.0
          %1550 = vmatpush1.msra.mxu0 0.0
          %1551 = vmatprep.subr.mxu0 0.0
          %1552 = vmatpush1.msra.mxu0 0.0
          %1553 = vmatprep.subr.mxu0 0.0
          %1554 = vmatpush1.msra.mxu0 0.0
          %1555 = vmatprep.subr.mxu0 0.0
          %1556 = vmatpush1.msra.mxu0 0.0
          %1557 = vmatprep.subr.mxu0 0.0
          %1558 = vmatpush1.msra.mxu0 0.0
          %1559 = vmatprep.subr.mxu0 0.0
          %1560 = vmatpush1.msra.mxu0 0.0
          %1561 = vmatprep.subr.mxu0 0.0
          %1562 = vmatpush1.msra.mxu0 0.0
          %1563 = vmatprep.subr.mxu0 0.0
          %1564 = vmatpush1.msra.mxu0 0.0
          %1565 = vmatprep.subr.mxu0 0.0
          %1566 = vmatpush1.msra.mxu0 0.0
          %1567 = vmatprep.subr.mxu0 0.0
          %1568 = vmatpush1.msra.mxu0 0.0
          %1569 = vmatprep.subr.mxu0 0.0
          %1570 = vmatpush1.msra.mxu0 0.0
          %1571 = vmatprep.mubr.f32.mxu0 0.0
          %1572 = vmatmul.mubr.f32.gmra.mrb[0].mxu0 %v1500
          %v1573 = vpop.f32.mrb[0].mxu0
          %v1574 = vadd.f32 0.0, %v1573
          %v1575 = vpop.f32.mrb[0].mxu0
          %1576 = vmatprep.mubr.f32.mxu0 0.0
          %1577 = vmatmul.mubr.f32.gmra.mrb[0].mxu0 %v1503
          %v1578 = vpop.f32.mrb[0].mxu0
          %v1579 = vadd.f32 0.0, %v1578
          %v1580 = vpop.f32.mrb[0].mxu0
          %1581 = vdwg.mxu0
          %v1582 = vadd.f32 %v1466, %v1574
          %v1583 = vadd.f32 %v1471, %v1579
          %v1584 = vlaneseq
          %v1585 = vshrl.u32 %v1584, 7
          %v1586 = vsub.s32 7, %v1585
          %v1587 = vrot.slane %v561, %v1586
          %v1588 = vadd.f32 %v1582, %v1587
          %v1589 = vadd.f32 %v1583, %v1587
          %vm1590 = vcmp.gt.f32.partialorder %v1588, 0.0
          %vm1591 = vcmp.gt.f32.partialorder %v1589, 0.0
          %v1592 = vmin.f32 %v1588, 0.0
          %v1593 = vmin.f32 %v1589, 0.0
          %v1594 = vmul.f32 %v1592, 1.442695
          %v1595 = vpow.pop %v1594
          %v1596 = vmul.f32 %v1593, 1.442695
          %v1597 = vpow.pop %v1596
          %v1598 = vsub.f32 %v1595, 1.0
          %v1599 = vsub.f32 %v1597, 1.0
          %v1600 = vsel %vm1590, %v1588, %v1598
          %v1601 = vsel %vm1591, %v1589, %v1599
          %v1602 = vlaneseq
          %v1603 = vshrl.u32 %v1602, 7
          %v1604 = vsub.s32 6, %v1603
          %v1605 = vrot.slane %v565, %v1604
          %v1607 = vsel %vm1390, %v1600, 0
          %v1610 = vsel %vm1390, %v1601, 0
          %v1613 = vsel %vm799, %v565, 0
          %1615 = vmatprep.subr.mxu0 0.0
          %1616 = vmatpush1.msra.mxu0 %v562
          %1617 = vmatprep.subr.mxu0 0.0
          %1618 = vmatpush1.msra.mxu0 %v563
          %1619 = vmatprep.subr.mxu0 0.0
          %1620 = vmatpush1.msra.mxu0 %v564
          %1621 = vmatprep.subr.mxu0 0.0
          %1622 = vmatpush1.msra.mxu0 %v1613
          %1623 = vmatprep.subr.mxu0 0.0
          %1624 = vmatpush1.msra.mxu0 0.0
          %1625 = vmatprep.subr.mxu0 0.0
          %1626 = vmatpush1.msra.mxu0 0.0
          %1627 = vmatprep.subr.mxu0 0.0
          %1628 = vmatpush1.msra.mxu0 0.0
          %1629 = vmatprep.subr.mxu0 0.0
          %1630 = vmatpush1.msra.mxu0 0.0
          %1631 = vmatprep.subr.mxu0 0.0
          %1632 = vmatpush1.msra.mxu0 0.0
          %1633 = vmatprep.subr.mxu0 0.0
          %1634 = vmatpush1.msra.mxu0 0.0
          %1635 = vmatprep.subr.mxu0 0.0
          %1636 = vmatpush1.msra.mxu0 0.0
          %1637 = vmatprep.subr.mxu0 0.0
          %1638 = vmatpush1.msra.mxu0 0.0
          %1639 = vmatprep.subr.mxu0 0.0
          %1640 = vmatpush1.msra.mxu0 0.0
          %1641 = vmatprep.subr.mxu0 0.0
          %1642 = vmatpush1.msra.mxu0 0.0
          %1643 = vmatprep.subr.mxu0 0.0
          %1644 = vmatpush1.msra.mxu0 0.0
          %1645 = vmatprep.subr.mxu0 0.0
          %1646 = vmatpush1.msra.mxu0 0.0
          %1647 = vmatprep.subr.mxu0 0.0
          %1648 = vmatpush1.msra.mxu0 0.0
          %1649 = vmatprep.subr.mxu0 0.0
          %1650 = vmatpush1.msra.mxu0 0.0
          %1651 = vmatprep.subr.mxu0 0.0
          %1652 = vmatpush1.msra.mxu0 0.0
          %1653 = vmatprep.subr.mxu0 0.0
          %1654 = vmatpush1.msra.mxu0 0.0
          %1655 = vmatprep.subr.mxu0 0.0
          %1656 = vmatpush1.msra.mxu0 0.0
          %1657 = vmatprep.subr.mxu0 0.0
          %1658 = vmatpush1.msra.mxu0 0.0
          %1659 = vmatprep.subr.mxu0 0.0
          %1660 = vmatpush1.msra.mxu0 0.0
          %1661 = vmatprep.subr.mxu0 0.0
          %1662 = vmatpush1.msra.mxu0 0.0
          %1663 = vmatprep.subr.mxu0 0.0
          %1664 = vmatpush1.msra.mxu0 0.0
          %1665 = vmatprep.subr.mxu0 0.0
          %1666 = vmatpush1.msra.mxu0 0.0
          %1667 = vmatprep.subr.mxu0 0.0
          %1668 = vmatpush1.msra.mxu0 0.0
          %1669 = vmatprep.subr.mxu0 0.0
          %1670 = vmatpush1.msra.mxu0 0.0
          %1671 = vmatprep.subr.mxu0 0.0
          %1672 = vmatpush1.msra.mxu0 0.0
          %1673 = vmatprep.subr.mxu0 0.0
          %1674 = vmatpush1.msra.mxu0 0.0
          %1675 = vmatprep.subr.mxu0 0.0
          %1676 = vmatpush1.msra.mxu0 0.0
          %1677 = vmatprep.subr.mxu0 0.0
          %1678 = vmatpush1.msra.mxu0 0.0
          %1679 = vmatprep.mubr.f32.mxu0 0.0
          %1680 = vmatmul.mubr.f32.gmra.mrb[0].mxu0 %v1607
          %v1681 = vpop.f32.mrb[0].mxu0
          %v1682 = vadd.f32 %v1605, %v1681
          %v1683 = vpop.f32.mrb[0].mxu0
          %1684 = vmatprep.mubr.f32.mxu0 0.0
          %1685 = vmatmul.mubr.f32.gmra.mrb[0].mxu0 %v1610
          %v1686 = vpop.f32.mrb[0].mxu0
          %v1687 = vadd.f32 %v1605, %v1686
          %v1688 = vpop.f32.mrb[0].mxu0
          %1689 = vdwg.mxu0
          %vm1690 = vcmp.gt.f32.partialorder %v1682, 0.0
          %vm1691 = vcmp.gt.f32.partialorder %v1687, 0.0
          %v1692 = vmin.f32 %v1682, 0.0
          %v1693 = vmin.f32 %v1687, 0.0
          %v1694 = vmul.f32 %v1692, 1.442695
          %v1695 = vpow.pop %v1694
          %v1696 = vmul.f32 %v1693, 1.442695
          %v1697 = vpow.pop %v1696
          %v1698 = vsub.f32 %v1695, 1.0
          %v1699 = vsub.f32 %v1697, 1.0
          %v1700 = vsel %vm1690, %v1682, %v1698
          %v1701 = vsel %vm1691, %v1687, %v1699
          %v1702 = vlaneseq
          %v1703 = vshrl.u32 %v1702, 7
          %v1704 = vsub.s32 2, %v1703
          %v1705 = vrot.slane %v567, %v1704
          %vm1706 = vcmask 80896
          %v1708 = vsel %vm1706, %v1700, 0
          %v1711 = vsel %vm1706, %v1701, 0
          %v1714 = vsel %vm602, %v567, 0
          %1716 = vmatprep.subr.mxu0 0.0
          %1717 = vmatpush1.msra.mxu0 %v566
          %1718 = vmatprep.subr.mxu0 0.0
          %1719 = vmatpush1.msra.mxu0 %v1714
          %1720 = vmatprep.subr.mxu0 0.0
          %1721 = vmatpush1.msra.mxu0 0.0
          %1722 = vmatprep.subr.mxu0 0.0
          %1723 = vmatpush1.msra.mxu0 0.0
          %1724 = vmatprep.subr.mxu0 0.0
          %1725 = vmatpush1.msra.mxu0 0.0
          %1726 = vmatprep.subr.mxu0 0.0
          %1727 = vmatpush1.msra.mxu0 0.0
          %1728 = vmatprep.subr.mxu0 0.0
          %1729 = vmatpush1.msra.mxu0 0.0
          %1730 = vmatprep.subr.mxu0 0.0
          %1731 = vmatpush1.msra.mxu0 0.0
          %1732 = vmatprep.subr.mxu0 0.0
          %1733 = vmatpush1.msra.mxu0 0.0
          %1734 = vmatprep.subr.mxu0 0.0
          %1735 = vmatpush1.msra.mxu0 0.0
          %1736 = vmatprep.subr.mxu0 0.0
          %1737 = vmatpush1.msra.mxu0 0.0
          %1738 = vmatprep.subr.mxu0 0.0
          %1739 = vmatpush1.msra.mxu0 0.0
          %1740 = vmatprep.subr.mxu0 0.0
          %1741 = vmatpush1.msra.mxu0 0.0
          %1742 = vmatprep.subr.mxu0 0.0
          %1743 = vmatpush1.msra.mxu0 0.0
          %1744 = vmatprep.subr.mxu0 0.0
          %1745 = vmatpush1.msra.mxu0 0.0
          %1746 = vmatprep.subr.mxu0 0.0
          %1747 = vmatpush1.msra.mxu0 0.0
          %1748 = vmatprep.subr.mxu0 0.0
          %1749 = vmatpush1.msra.mxu0 0.0
          %1750 = vmatprep.subr.mxu0 0.0
          %1751 = vmatpush1.msra.mxu0 0.0
          %1752 = vmatprep.subr.mxu0 0.0
          %1753 = vmatpush1.msra.mxu0 0.0
          %1754 = vmatprep.subr.mxu0 0.0
          %1755 = vmatpush1.msra.mxu0 0.0
          %1756 = vmatprep.subr.mxu0 0.0
          %1757 = vmatpush1.msra.mxu0 0.0
          %1758 = vmatprep.subr.mxu0 0.0
          %1759 = vmatpush1.msra.mxu0 0.0
          %1760 = vmatprep.subr.mxu0 0.0
          %1761 = vmatpush1.msra.mxu0 0.0
          %1762 = vmatprep.subr.mxu0 0.0
          %1763 = vmatpush1.msra.mxu0 0.0
          %1764 = vmatprep.subr.mxu0 0.0
          %1765 = vmatpush1.msra.mxu0 0.0
          %1766 = vmatprep.subr.mxu0 0.0
          %1767 = vmatpush1.msra.mxu0 0.0
          %1768 = vmatprep.subr.mxu0 0.0
          %1769 = vmatpush1.msra.mxu0 0.0
          %1770 = vmatprep.subr.mxu0 0.0
          %1771 = vmatpush1.msra.mxu0 0.0
          %1772 = vmatprep.subr.mxu0 0.0
          %1773 = vmatpush1.msra.mxu0 0.0
          %1774 = vmatprep.subr.mxu0 0.0
          %1775 = vmatpush1.msra.mxu0 0.0
          %1776 = vmatprep.subr.mxu0 0.0
          %1777 = vmatpush1.msra.mxu0 0.0
          %1778 = vmatprep.subr.mxu0 0.0
          %1779 = vmatpush1.msra.mxu0 0.0
          %1780 = vmatprep.mubr.f32.mxu0 0.0
          %1781 = vmatmul.mubr.f32.gmra.mrb[0].mxu0 %v1708
          %v1782 = vpop.f32.mrb[0].mxu0
          %v1783 = vadd.f32 %v1705, %v1782
          %v1784 = vpop.f32.mrb[0].mxu0
          %1785 = vmatprep.mubr.f32.mxu0 0.0
          %1786 = vmatmul.mubr.f32.gmra.mrb[0].mxu0 %v1711
          %v1787 = vpop.f32.mrb[0].mxu0
          %v1788 = vadd.f32 %v1705, %v1787
          %v1789 = vpop.f32.mrb[0].mxu0
          %1790 = vdwg.mxu0
          %vm1791 = vcmask 7168
          %1792 = vst.msk [vmem:[%s372] sm:$0xff] %vm1791, %v1783
          %1793 = vst.msk [vmem:[%s372 + $0x8] sm:$0xff] %vm1791, %v1788
        $region83: #{tpu_custom_call.1} parent=70 // pred_fallthru
          _
        %s1794 = smul.u32 2, %s24
        %p1795 = scmp.lt.s32.totalorder %s1794, 3
        %s1796 = scalar_select %p1795, %s1794, 3
        %s1797 = smul.addr %s1796, 8
        %s1798 = scalar_lea.vmem %s8, %s1797
        // Predicated region
        $region84: #{tpu_custom_call.1} parent=70 // pred_check
          %p1799 = pneg %p229
        $region85: #{tpu_custom_call.1} parent=70 // pred_check_branch
          %1801 = sbr.rel (%p1799) target = $region87
        $region86: #{tpu_custom_call.1} parent=70 // pred_region
          %s1802 = smul.u32 2, %s24
        $region87: #{tpu_custom_call.1} parent=70 // pred_fallthru
          _
      $region71: #{tpu_custom_call.1} parent=5 // pred_fallthru
        _
      %p1803 = scmp.le.s32.totalorder 2, %s14
      // Predicated region
      $region88: #{tpu_custom_call.1} parent=5 // pred_check
        %p1804 = pneg %p1803
      $region89: #{tpu_custom_call.1} parent=5 // pred_check_branch
        %1806 = sbr.rel (%p1804) target = $region91
      $region90: #{tpu_custom_call.1} parent=5 // pred_region
        %s1807 = ssub.s32 %s14, 2
        // Predicated region
        $region92: #{tpu_custom_call.1} parent=90 // pred_check
          %p1808 = pneg %p235
        $region93: #{tpu_custom_call.1} parent=90 // pred_check_branch
          %1810 = sbr.rel (%p1808) target = $region95
        $region94: #{tpu_custom_call.1} parent=90 // pred_region
          %s1811 = smul.u32 2, %s26
          %p1812 = scmp.lt.s32.totalorder %s1811, 3
          %s1813 = scalar_select %p1812, %s1811, 3
          %s1814 = smul.addr %s1813, 8
          %s1815 = scalar_lea.vmem %s8, %s1814
        $region95: #{tpu_custom_call.1} parent=90 // pred_fallthru
          _
      $region91: #{tpu_custom_call.1} parent=5 // pred_fallthru
        _
    $region6: #{tpu_custom_call.1} parent=1 // loop_footer
      %s18 = sadd.s32 1, %s14
    $region7: #{tpu_custom_call.1} parent=1 // loop_footer_branch
      %13 = sbr.rel target = $region3
    $region8: #{tpu_custom_call.1} parent=1 // loop_exit
      _

</llo_original>
